<compile_context>
chip_gen: v7x
topology: tpu7x:2x2x1
jax: 0.10.0
libtpu: 0.0.40
codegen_flags: <defaults>
</compile_context>

<pallas_src>
import jax
import jax.numpy as jnp
from jax.experimental import pallas as pl
from jax.experimental.pallas import tpu as pltpu

K_IN = 784          # input features (28*28)
H1, H2 = 512, 256   # hidden widths
N_OUT = 1           # output logits
MIN_TILES = 4       # keep >=2 grid steps per v7x TensorCore


def _round_up(n, m):
    return ((n + m - 1) // m) * m


def discriminator_kernel(x_ref, w1_ref, b1_ref, w2_ref, b2_ref, w3_ref, b3_ref,
                         o_ref):
    # f32 -> bf16 cast done in-kernel (no separate XLA pad/cast pass over x).
    x = x_ref[...].astype(jnp.bfloat16)                       # (tm, 784)

    # Layer 1: (tm, 784) @ (784, 512), bf16 operands, f32 accumulate (MXU).
    h1 = jnp.dot(x, w1_ref[...], preferred_element_type=jnp.float32)
    h1 = h1 + b1_ref[...]
    h1 = jnp.maximum(h1, 0.2 * h1)                             # LeakyReLU(0.2)

    # Layer 2: (tm, 512) @ (512, 256), bf16 operands, f32 accumulate.
    h2 = jnp.dot(h1.astype(jnp.bfloat16), w2_ref[...],
                 preferred_element_type=jnp.float32)
    h2 = h2 + b2_ref[...]
    h2 = jnp.maximum(h2, 0.2 * h2)                             # LeakyReLU(0.2)

    # Layer 3: single real output column -> VPU multiply + XLU lane-reduce
    # (skips a mostly-zero MXU push; ~3% of FLOPs, runs on otherwise-idle
    # units).  f32 throughout.
    logit = jnp.sum(h2 * w3_ref[...], axis=-1, keepdims=True) + b3_ref[...]
    o_ref[...] = jax.nn.sigmoid(logit).astype(o_ref.dtype)     # EUP sigmoid


def discriminator_forward(x, params, *, block_m=1024):
    """x: any array reshapeable to (B, 784) -> (B, 1) float32 probabilities."""
    w1, b1, w2, b2, w3, b3 = params
    x2 = x.reshape(-1, K_IN)
    B = x2.shape[0]

    # Batch tile: multiple of 8 (sublane rule), capped at block_m, and capped
    # so the grid has >= MIN_TILES steps (v7x megacore + pipeline depth).
    tm = min(block_m, pl.cdiv(B, MIN_TILES))
    tm = _round_up(max(tm, 8), 8)
    bp = _round_up(B, tm)
    grid = (bp // tm,)

    # Only the batch dim is padded, and only when needed (no feature pad/cast).
    if bp != B:
        x2 = jnp.pad(x2, ((0, bp - B), (0, 0)))

    flops = 2 * bp * (K_IN * H1 + H1 * H2 + H2)
    bytes_accessed = (bp * K_IN * 4                      # x (f32, read once)
                      + w1.size * 2 + w2.size * 2        # bf16 weights
                      + (b1.size + b2.size + w3.size + b3.size) * 4
                      + bp * 4)                          # narrow output
    cost = pl.CostEstimate(flops=flops, transcendentals=bp,
                           bytes_accessed=bytes_accessed)

    out = pl.pallas_call(
        discriminator_kernel,
        out_shape=jax.ShapeDtypeStruct((bp, N_OUT), jnp.float32),
        grid=grid,
        in_specs=[
            pl.BlockSpec((tm, K_IN), lambda i: (i, 0)),   # x tile (streamed)
            pl.BlockSpec((K_IN, H1), lambda i: (0, 0)),   # w1 (VMEM-resident)
            pl.BlockSpec((1, H1), lambda i: (0, 0)),      # b1
            pl.BlockSpec((H1, H2), lambda i: (0, 0)),     # w2
            pl.BlockSpec((1, H2), lambda i: (0, 0)),      # b2
            pl.BlockSpec((1, H2), lambda i: (0, 0)),      # w3 row (1, 256)
            pl.BlockSpec((1, N_OUT), lambda i: (0, 0)),   # b3 (1, 1)
        ],
        out_specs=pl.BlockSpec((tm, N_OUT), lambda i: (i, 0)),
        compiler_params=pltpu.CompilerParams(
            dimension_semantics=("parallel",),
            vmem_limit_bytes=32 * 1024 * 1024),
        cost_estimate=cost,
    )(x2, w1, b1, w2, b2, w3, b3)

    # Drop batch padding only; output is already (.., 1) like the torch module.
    return out if bp == B else out[:B]


def init_linear(key, fan_in, fan_out):
    """nn.Linear default init: U(-1/sqrt(fan_in), +1/sqrt(fan_in))."""
    kw, kb = jax.random.split(key)
    bound = 1.0 / jnp.sqrt(jnp.float32(fan_in))
    # stored (in, out) so the kernel computes x @ W + b directly
    w = jax.random.uniform(kw, (fan_in, fan_out), jnp.float32, -bound, bound)
    b = jax.random.uniform(kb, (1, fan_out), jnp.float32, -bound, bound)
    return w, b


def init_discriminator_params(key):
    """Kernel-layout params: bf16 (in, out) matmul weights, f32 biases,
    layer-3 weight stored as a (1, 256) f32 row for the VPU/XLU path."""
    k1, k2, k3 = jax.random.split(key, 3)
    w1, b1 = init_linear(k1, K_IN, H1)     # (784, 512), (1, 512)
    w2, b2 = init_linear(k2, H1, H2)       # (512, 256), (1, 256)
    w3, b3 = init_linear(k3, H2, N_OUT)    # (256, 1),   (1, 1)
    return (w1.astype(jnp.bfloat16), b1,
            w2.astype(jnp.bfloat16), b2,
            w3.reshape(1, H2),             # row layout, f32
            b3)                            # (1, 1), f32


if __name__ == "__main__":
    key = jax.random.PRNGKey(0)
    kp, kx = jax.random.split(key)

    params = init_discriminator_params(kp)

    # Small MNIST-like batch; block_m=8 exercises a multi-tile grid (2 tiles)
    # plus batch padding (12 -> 16).
    B = 12
    x = jax.random.normal(kx, (B, 1, 28, 28), jnp.float32)

    out = discriminator_forward(x, params, block_m=8)
    out = jax.block_until_ready(out)

    assert out.shape == (B, N_OUT), out.shape
    assert out.dtype == jnp.float32, out.dtype

    # Pure-JAX reference with the same numerics (bf16 matmul operands,
    # f32 accumulation, f32 layer-3 reduction).
    w1, b1, w2, b2, w3, b3 = params
    x2 = x.reshape(-1, K_IN)
    h1 = jnp.dot(x2.astype(jnp.bfloat16), w1,
                 preferred_element_type=jnp.float32) + b1
    h1 = jnp.maximum(h1, 0.2 * h1)
    h2 = jnp.dot(h1.astype(jnp.bfloat16), w2,
                 preferred_element_type=jnp.float32) + b2
    h2 = jnp.maximum(h2, 0.2 * h2)
    logits = jnp.sum(h2 * w3, axis=-1, keepdims=True) + b3
    ref = jax.nn.sigmoid(logits)

    assert jnp.allclose(out, ref, atol=2e-3, rtol=2e-3), (
        float(jnp.max(jnp.abs(out - ref))))
    assert bool(jnp.all((out >= 0.0) & (out <= 1.0)))

    print("KERNEL_OK")
</pallas_src>

<mosaic_0001>
module attributes {stable_mosaic.version = 11 : i64} {
  func.func @discriminator_kernel(%arg0: i32, %arg1: memref<8x784xf32, #tpu.memory_space<vmem>>, %arg2: memref<784x512xbf16, #tpu.memory_space<vmem>>, %arg3: memref<1x512xf32, #tpu.memory_space<vmem>>, %arg4: memref<512x256xbf16, #tpu.memory_space<vmem>>, %arg5: memref<1x256xf32, #tpu.memory_space<vmem>>, %arg6: memref<1x256xf32, #tpu.memory_space<vmem>>, %arg7: memref<1x1xf32, #tpu.memory_space<vmem>>, %arg8: memref<8x1xf32, #tpu.memory_space<vmem>>) attributes {dimension_semantics = [#tpu.dimension_semantics<parallel>], iteration_bounds = array<i64: 2>, scalar_prefetch = 0 : i64, scratch_operands = 0 : i64, tpu.core_type = #tpu.core_type<tc>, window_params = [{transform_indices = @transform_0, window_bounds = array<i64: 8, 784>}, {pipeline_mode = #tpu.pipeline_mode<synchronous>, transform_indices = @transform_1, window_bounds = array<i64: 784, 512>}, {pipeline_mode = #tpu.pipeline_mode<synchronous>, transform_indices = @transform_2, window_bounds = array<i64: 1, 512>}, {pipeline_mode = #tpu.pipeline_mode<synchronous>, transform_indices = @transform_3, window_bounds = array<i64: 512, 256>}, {pipeline_mode = #tpu.pipeline_mode<synchronous>, transform_indices = @transform_4, window_bounds = array<i64: 1, 256>}, {pipeline_mode = #tpu.pipeline_mode<synchronous>, transform_indices = @transform_5, window_bounds = array<i64: 1, 256>}, {pipeline_mode = #tpu.pipeline_mode<synchronous>, transform_indices = @transform_6, window_bounds = array<i64: 1, 1>}, {transform_indices = @transform_7, window_bounds = array<i64: 8, 1>}]} {
    %c0 = arith.constant 0 : index
    %c0_0 = arith.constant 0 : index
    %0 = vector.load %arg1[%c0, %c0_0] : memref<8x784xf32, #tpu.memory_space<vmem>>, vector<8x784xf32>
    %1 = arith.truncf %0 : vector<8x784xf32> to vector<8x784xbf16>
    %c0_1 = arith.constant 0 : index
    %c0_2 = arith.constant 0 : index
    %2 = vector.load %arg2[%c0_1, %c0_2] : memref<784x512xbf16, #tpu.memory_space<vmem>>, vector<784x512xbf16>
    %cst = arith.constant dense<0.000000e+00> : vector<8x512xf32>
    %3 = tpu.matmul %1, %2, %cst {dimension_numbers = #tpu.dot_dimension_numbers<[1], [0], [0], [1], [0, 0, 1, 1], [], []>} : vector<8x784xbf16>, vector<784x512xbf16>, vector<8x512xf32> -> vector<8x512xf32>
    %c0_3 = arith.constant 0 : index
    %c0_4 = arith.constant 0 : index
    %4 = vector.load %arg3[%c0_3, %c0_4] : memref<1x512xf32, #tpu.memory_space<vmem>>, vector<1x512xf32>
    %5 = vector.broadcast %4 : vector<1x512xf32> to vector<8x512xf32>
    %6 = arith.addf %3, %5 : vector<8x512xf32>
    %cst_5 = arith.constant 2.000000e-01 : f32
    %7 = vector.broadcast %cst_5 : f32 to vector<8x512xf32>
    %8 = arith.mulf %7, %6 : vector<8x512xf32>
    %9 = arith.maximumf %6, %8 : vector<8x512xf32>
    %10 = arith.truncf %9 : vector<8x512xf32> to vector<8x512xbf16>
    %c0_6 = arith.constant 0 : index
    %c0_7 = arith.constant 0 : index
    %11 = vector.load %arg4[%c0_6, %c0_7] : memref<512x256xbf16, #tpu.memory_space<vmem>>, vector<512x256xbf16>
    %cst_8 = arith.constant dense<0.000000e+00> : vector<8x256xf32>
    %12 = tpu.matmul %10, %11, %cst_8 {dimension_numbers = #tpu.dot_dimension_numbers<[1], [0], [0], [1], [0, 0, 1, 1], [], []>} : vector<8x512xbf16>, vector<512x256xbf16>, vector<8x256xf32> -> vector<8x256xf32>
    %c0_9 = arith.constant 0 : index
    %c0_10 = arith.constant 0 : index
    %13 = vector.load %arg5[%c0_9, %c0_10] : memref<1x256xf32, #tpu.memory_space<vmem>>, vector<1x256xf32>
    %14 = vector.broadcast %13 : vector<1x256xf32> to vector<8x256xf32>
    %15 = arith.addf %12, %14 : vector<8x256xf32>
    %cst_11 = arith.constant 2.000000e-01 : f32
    %16 = vector.broadcast %cst_11 : f32 to vector<8x256xf32>
    %17 = arith.mulf %16, %15 : vector<8x256xf32>
    %18 = arith.maximumf %15, %17 : vector<8x256xf32>
    %c0_12 = arith.constant 0 : index
    %c0_13 = arith.constant 0 : index
    %19 = vector.load %arg6[%c0_12, %c0_13] : memref<1x256xf32, #tpu.memory_space<vmem>>, vector<1x256xf32>
    %20 = vector.broadcast %19 : vector<1x256xf32> to vector<8x256xf32>
    %21 = arith.mulf %18, %20 : vector<8x256xf32>
    %cst_14 = arith.constant dense<0.000000e+00> : vector<8xf32>
    %22 = vector.multi_reduction <add>, %21, %cst_14 [1] : vector<8x256xf32> to vector<8xf32>
    %23 = vector.shape_cast %22 : vector<8xf32> to vector<8x1xf32>
    %c0_15 = arith.constant 0 : index
    %c0_16 = arith.constant 0 : index
    %24 = vector.load %arg7[%c0_15, %c0_16] : memref<1x1xf32, #tpu.memory_space<vmem>>, vector<1x1xf32>
    %25 = vector.broadcast %24 : vector<1x1xf32> to vector<8x1xf32>
    %26 = arith.addf %23, %25 : vector<8x1xf32>
    %27 = arith.negf %26 : vector<8x1xf32>
    %28 = math.exp %27 : vector<8x1xf32>
    %cst_17 = arith.constant 1.000000e+00 : f32
    %29 = vector.broadcast %cst_17 : f32 to vector<8x1xf32>
    %30 = arith.addf %29, %28 : vector<8x1xf32>
    %31 = arith.divf %29, %30 : vector<8x1xf32>
    %c0_18 = arith.constant 0 : index
    %c0_19 = arith.constant 0 : index
    %32 = vector.load %arg8[%c0_18, %c0_19] : memref<8x1xf32, #tpu.memory_space<vmem>>, vector<8x1xf32>
    tpu.vector_store %arg8[%c0_18, %c0_19], %31 {strides = array<i32>} : memref<8x1xf32, #tpu.memory_space<vmem>>, vector<8x1xf32>,
    return
  }
  func.func @transform_0(%arg0: i32) -> (i32, i32) {
    %c0_i32 = arith.constant 0 : i32
    %c0_i32_0 = arith.constant 0 : i32
    return %arg0, %c0_i32 : i32, i32
  }
  func.func @transform_1(%arg0: i32) -> (i32, i32) {
    %c0_i32 = arith.constant 0 : i32
    %c0_i32_0 = arith.constant 0 : i32
    %c0_i32_1 = arith.constant 0 : i32
    return %c0_i32, %c0_i32_0 : i32, i32
  }
  func.func @transform_2(%arg0: i32) -> (i32, i32) {
    %c0_i32 = arith.constant 0 : i32
    %c0_i32_0 = arith.constant 0 : i32
    %c0_i32_1 = arith.constant 0 : i32
    return %c0_i32, %c0_i32_0 : i32, i32
  }
  func.func @transform_3(%arg0: i32) -> (i32, i32) {
    %c0_i32 = arith.constant 0 : i32
    %c0_i32_0 = arith.constant 0 : i32
    %c0_i32_1 = arith.constant 0 : i32
    return %c0_i32, %c0_i32_0 : i32, i32
  }
  func.func @transform_4(%arg0: i32) -> (i32, i32) {
    %c0_i32 = arith.constant 0 : i32
    %c0_i32_0 = arith.constant 0 : i32
    %c0_i32_1 = arith.constant 0 : i32
    return %c0_i32, %c0_i32_0 : i32, i32
  }
  func.func @transform_5(%arg0: i32) -> (i32, i32) {
    %c0_i32 = arith.constant 0 : i32
    %c0_i32_0 = arith.constant 0 : i32
    %c0_i32_1 = arith.constant 0 : i32
    return %c0_i32, %c0_i32_0 : i32, i32
  }
  func.func @transform_6(%arg0: i32) -> (i32, i32) {
    %c0_i32 = arith.constant 0 : i32
    %c0_i32_0 = arith.constant 0 : i32
    %c0_i32_1 = arith.constant 0 : i32
    return %c0_i32, %c0_i32_0 : i32, i32
  }
  func.func @transform_7(%arg0: i32) -> (i32, i32) {
    %c0_i32 = arith.constant 0 : i32
    %c0_i32_0 = arith.constant 0 : i32
    return %arg0, %c0_i32 : i32, i32
  }
}

</mosaic_0001>

<llo_original>
// kernel: tpu_custom_call.1
$region0: #{tpu_custom_call.1}
  #allocation0 [shape = 'u32[]', space=smem, size = 0x4, offset = 0x4, fixed_abs, tag = 'smem constant byte address 0x4 - core index']
  #allocation1 [shape = 'u32[144,128]{1,0:T(1,128)}', space=vmem, size = 0x12000, scoped, tag = 'internal scratch']
  #allocation2 [shape = 'f32[1,1]{1,0:T(1,128)S(1)}', space=vmem, size = 0x200, scoped, tag = 'scoped memory for tpu_custom_call.1']
  %s0 = inlined_call_operand.hbm [shape: f32[16,784], index: 0, kind: input, shape index: {}]
  %s1 = inlined_call_operand.hbm [shape: bf16[784,512], index: 1, kind: input, shape index: {}]
  %s2 = inlined_call_operand.vmem [shape: f32[1,512], index: 2, kind: input, shape index: {}]
  %s3 = inlined_call_operand.hbm [shape: bf16[512,256], index: 3, kind: input, shape index: {}]
  %s4 = inlined_call_operand.vmem [shape: f32[1,256], index: 4, kind: input, shape index: {}]
  %s5 = inlined_call_operand.vmem [shape: f32[1,256], index: 5, kind: input, shape index: {}]
  %s6 = inlined_call_operand.<no memory space> [shape: f32[1,1], index: 6, kind: input, shape index: {}]
  %s7 = inlined_call_operand.vmem [shape: f32[16,1], index: 7, kind: output, shape index: {}]
  %s8 = sld [smem:[#allocation0]]
  $region73: #{tpu_custom_call.1} parent=0
    _
  %s10 = ssub.s32 1, %s8
  %s11 = scalar_select 0, %s10, %s8
  %v12 = vstv %s6
  %13 = vst [vmem:[#allocation2] sm:$0x1] %v12
  $region1: #{tpu_custom_call.1} parent=0
    #allocation3 [shape = 'u8[57344]{0}', space=vmem, size = 0xe000, scoped, tag = 'input window, operand 0']
    #allocation4 [shape = 's32[2]{0}', space=sflag, size = 0x8, scoped, tag = 'scoped memory for tpu_custom_call.1']
    #allocation5 [shape = 'u8[802816]{0}', space=vmem, size = 0xc4000, scoped, tag = 'input window, operand 1, single buffered']
    #allocation6 [shape = 's32[1]{0}', space=sflag, size = 0x4, scoped, tag = 'scoped memory for tpu_custom_call.1']
    #allocation7 [shape = 'u8[262144]{0}', space=vmem, size = 0x40000, scoped, tag = 'input window, operand 3, single buffered']
    %14 = vsyncpa [#allocation4], 0
    %s15 = scalar_lea.sflag [#allocation4], 1
    %16 = vsyncpa %s15, 0
    %17 = vsyncpa [#allocation6], 0
    loop: start=0, step=1, limit=4
    $region2: #{tpu_custom_call.1} parent=1 // loop_pre_header
      _
    $region3: #{tpu_custom_call.1} parent=1 // loop_header
      %s19 = sphi 0, %s23
      %p20 = scmp.ge.s32.totalorder %s19, 4
      %s29 = sphi 0, %s31
      %s32 = sphi 0, %s29
      %s33 = sphi 0, %s32
      %s49 = sphi 0, %s33
      %s53 = sphi 0, %s53
      %s55 = sphi 0, %s53
      %s56 = sphi 0, %s55
      %s70 = sphi 0, %s56
      %s74 = sphi 0, %s74
      %s76 = sphi 0, %s74
      %s77 = sphi 0, %s76
      %s91 = sphi 0, %s77
      %s95 = sphi 0, %s95
      %s97 = sphi 0, %s95
      %s98 = sphi 0, %s97
      %s112 = sphi 0, %s98
      %s116 = sphi 0, %s116
      %s118 = sphi 0, %s116
      %s119 = sphi 0, %s118
      %s133 = sphi 0, %s119
      %s137 = sphi 0, %s137
      %s139 = sphi 0, %s137
      %s140 = sphi 0, %s139
      %s154 = sphi 0, %s140
      %s158 = sphi 0, %s158
      %s160 = sphi 0, %s158
      %s161 = sphi 0, %s160
      %s175 = sphi 0, %s161
      %s181 = sphi 0, %s183
      %s184 = sphi 0, %s181
      %s185 = sphi 0, %s184
      %s201 = sphi 0, %s185
    $region4: #{tpu_custom_call.1} parent=1 // loop_header_branch
      %22 = sbr.rel (%p20) target = $region8
    $region5: #{tpu_custom_call.1} parent=1 // loop_body
      %s24 = ssub.s32 %s19, 1
      %s25 = ssub.s32 %s19, 2
      %s26 = sadd.s32 %s19, 1
      %s27 = ssub.s32 %s19, %s26
      %p28 = scmp.eq.s32.totalorder %s27, 0
      %s30 = sadd.s32 %s29, 1
      %s31 = scalar_select %p28, %s29, %s30
      %p34 = pneg %p28
      %p35 = scmp.eq.s32.totalorder %s19, 1
      %p36 = por %p34, %p35
      %p37 = scmp.ne.s32.totalorder %s29, %s32
      %p38 = scmp.eq.s32.totalorder %s19, 0
      %p39 = por %p37, %p38
      %p40 = scmp.ne.s32.totalorder %s29, %s32
      %p41 = scmp.eq.s32.totalorder %s24, 1
      %p42 = por %p40, %p41
      %p43 = scmp.ne.s32.totalorder %s32, %s33
      %p44 = scmp.eq.s32.totalorder %s24, 0
      %p45 = por %p43, %p44
      %p46 = scmp.ne.s32.totalorder %s32, %s33
      %p47 = scmp.eq.s32.totalorder %s25, 1
      %p48 = por %p46, %p47
      %p50 = scmp.ne.s32.totalorder %s33, %s49
      %p51 = scmp.eq.s32.totalorder %s25, 0
      %p52 = por %p50, %p51
      %s54 = sadd.s32 %s53, 1
      %p57 = scmp.eq.s32.totalorder %s19, 1
      %p58 = scmp.ne.s32.totalorder %s53, %s55
      %p59 = scmp.eq.s32.totalorder %s19, 0
      %p60 = por %p58, %p59
      %p61 = scmp.ne.s32.totalorder %s53, %s55
      %p62 = scmp.eq.s32.totalorder %s24, 1
      %p63 = por %p61, %p62
      %p64 = scmp.ne.s32.totalorder %s55, %s56
      %p65 = scmp.eq.s32.totalorder %s24, 0
      %p66 = por %p64, %p65
      %p67 = scmp.ne.s32.totalorder %s55, %s56
      %p68 = scmp.eq.s32.totalorder %s25, 1
      %p69 = por %p67, %p68
      %p71 = scmp.ne.s32.totalorder %s56, %s70
      %p72 = scmp.eq.s32.totalorder %s25, 0
      %p73 = por %p71, %p72
      %s75 = sadd.s32 %s74, 1
      %p78 = scmp.eq.s32.totalorder %s19, 1
      %p79 = scmp.ne.s32.totalorder %s74, %s76
      %p80 = scmp.eq.s32.totalorder %s19, 0
      %p81 = por %p79, %p80
      %p82 = scmp.ne.s32.totalorder %s74, %s76
      %p83 = scmp.eq.s32.totalorder %s24, 1
      %p84 = por %p82, %p83
      %p85 = scmp.ne.s32.totalorder %s76, %s77
      %p86 = scmp.eq.s32.totalorder %s24, 0
      %p87 = por %p85, %p86
      %p88 = scmp.ne.s32.totalorder %s76, %s77
      %p89 = scmp.eq.s32.totalorder %s25, 1
      %p90 = por %p88, %p89
      %p92 = scmp.ne.s32.totalorder %s77, %s91
      %p93 = scmp.eq.s32.totalorder %s25, 0
      %p94 = por %p92, %p93
      %s96 = sadd.s32 %s95, 1
      %p99 = scmp.eq.s32.totalorder %s19, 1
      %p100 = scmp.ne.s32.totalorder %s95, %s97
      %p101 = scmp.eq.s32.totalorder %s19, 0
      %p102 = por %p100, %p101
      %p103 = scmp.ne.s32.totalorder %s95, %s97
      %p104 = scmp.eq.s32.totalorder %s24, 1
      %p105 = por %p103, %p104
      %p106 = scmp.ne.s32.totalorder %s97, %s98
      %p107 = scmp.eq.s32.totalorder %s24, 0
      %p108 = por %p106, %p107
      %p109 = scmp.ne.s32.totalorder %s97, %s98
      %p110 = scmp.eq.s32.totalorder %s25, 1
      %p111 = por %p109, %p110
      %p113 = scmp.ne.s32.totalorder %s98, %s112
      %p114 = scmp.eq.s32.totalorder %s25, 0
      %p115 = por %p113, %p114
      %s117 = sadd.s32 %s116, 1
      %p120 = scmp.eq.s32.totalorder %s19, 1
      %p121 = scmp.ne.s32.totalorder %s116, %s118
      %p122 = scmp.eq.s32.totalorder %s19, 0
      %p123 = por %p121, %p122
      %p124 = scmp.ne.s32.totalorder %s116, %s118
      %p125 = scmp.eq.s32.totalorder %s24, 1
      %p126 = por %p124, %p125
      %p127 = scmp.ne.s32.totalorder %s118, %s119
      %p128 = scmp.eq.s32.totalorder %s24, 0
      %p129 = por %p127, %p128
      %p130 = scmp.ne.s32.totalorder %s118, %s119
      %p131 = scmp.eq.s32.totalorder %s25, 1
      %p132 = por %p130, %p131
      %p134 = scmp.ne.s32.totalorder %s119, %s133
      %p135 = scmp.eq.s32.totalorder %s25, 0
      %p136 = por %p134, %p135
      %s138 = sadd.s32 %s137, 1
      %p141 = scmp.eq.s32.totalorder %s19, 1
      %p142 = scmp.ne.s32.totalorder %s137, %s139
      %p143 = scmp.eq.s32.totalorder %s19, 0
      %p144 = por %p142, %p143
      %p145 = scmp.ne.s32.totalorder %s137, %s139
      %p146 = scmp.eq.s32.totalorder %s24, 1
      %p147 = por %p145, %p146
      %p148 = scmp.ne.s32.totalorder %s139, %s140
      %p149 = scmp.eq.s32.totalorder %s24, 0
      %p150 = por %p148, %p149
      %p151 = scmp.ne.s32.totalorder %s139, %s140
      %p152 = scmp.eq.s32.totalorder %s25, 1
      %p153 = por %p151, %p152
      %p155 = scmp.ne.s32.totalorder %s140, %s154
      %p156 = scmp.eq.s32.totalorder %s25, 0
      %p157 = por %p155, %p156
      %s159 = sadd.s32 %s158, 1
      %p162 = scmp.eq.s32.totalorder %s19, 1
      %p163 = scmp.ne.s32.totalorder %s158, %s160
      %p164 = scmp.eq.s32.totalorder %s19, 0
      %p165 = por %p163, %p164
      %p166 = scmp.ne.s32.totalorder %s158, %s160
      %p167 = scmp.eq.s32.totalorder %s24, 1
      %p168 = por %p166, %p167
      %p169 = scmp.ne.s32.totalorder %s160, %s161
      %p170 = scmp.eq.s32.totalorder %s24, 0
      %p171 = por %p169, %p170
      %p172 = scmp.ne.s32.totalorder %s160, %s161
      %p173 = scmp.eq.s32.totalorder %s25, 1
      %p174 = por %p172, %p173
      %p176 = scmp.ne.s32.totalorder %s161, %s175
      %p177 = scmp.eq.s32.totalorder %s25, 0
      %p178 = por %p176, %p177
      %s179 = ssub.s32 %s19, %s26
      %p180 = scmp.eq.s32.totalorder %s179, 0
      %s182 = sadd.s32 %s181, 1
      %s183 = scalar_select %p180, %s181, %s182
      %p186 = pneg %p180
      %p187 = scmp.eq.s32.totalorder %s19, 1
      %p188 = por %p186, %p187
      %p189 = scmp.ne.s32.totalorder %s181, %s184
      %p190 = scmp.eq.s32.totalorder %s19, 0
      %p191 = por %p189, %p190
      %p192 = scmp.ne.s32.totalorder %s181, %s184
      %p193 = scmp.eq.s32.totalorder %s24, 1
      %p194 = por %p192, %p193
      %p195 = scmp.ne.s32.totalorder %s184, %s185
      %p196 = scmp.eq.s32.totalorder %s24, 0
      %p197 = por %p195, %p196
      %p198 = scmp.ne.s32.totalorder %s184, %s185
      %p199 = scmp.eq.s32.totalorder %s25, 1
      %p200 = por %p198, %p199
      %p202 = scmp.ne.s32.totalorder %s185, %s201
      %p203 = scmp.eq.s32.totalorder %s25, 0
      %p204 = por %p202, %p203
      %p205 = scmp.le.s32.totalorder 1, %s19
      %p206 = scmp.lt.s32.totalorder %s19, 3
      %p207 = pnand %p205, %p206
      %p208 = pneg %p207
      // Predicated region
      $region9: #{tpu_custom_call.1} parent=5 // pred_check
        _
      $region10: #{tpu_custom_call.1} parent=5 // pred_check_branch
        %210 = sbr.rel (%p207) target = $region12
      $region11: #{tpu_custom_call.1} parent=5 // pred_region
        %s211 = ssub.s32 %s19, 1
        // Predicated region
        $region13: #{tpu_custom_call.1} parent=11 // pred_check
          %p212 = pneg %p66
        $region14: #{tpu_custom_call.1} parent=11 // pred_check_branch
          %214 = sbr.rel (%p212) target = $region16
        $region15: #{tpu_custom_call.1} parent=11 // pred_region
          %s216 = ssub.s32 25088, 25088
          %217 = vsyncadd [#allocation6], %s216
          %s218 = sshll.u32 [#allocation5], 4
          %s219 = int_to_ptr.vmem [resolvable:$true] %s218
          %224 = dma.hbm_to_vmem [thread:$0]  %s1, 25088, %s219, [#allocation6], 256, 256, 16
        $region16: #{tpu_custom_call.1} parent=11 // pred_fallthru
          _
        // Predicated region
        $region17: #{tpu_custom_call.1} parent=11 // pred_check
          %p225 = pneg %p87
        $region18: #{tpu_custom_call.1} parent=11 // pred_check_branch
          %227 = sbr.rel (%p225) target = $region20
        $region19: #{tpu_custom_call.1} parent=11 // pred_region
          _
        $region20: #{tpu_custom_call.1} parent=11 // pred_fallthru
          _
        // Predicated region
        $region21: #{tpu_custom_call.1} parent=11 // pred_check
          %p228 = pneg %p108
        $region22: #{tpu_custom_call.1} parent=11 // pred_check_branch
          %230 = sbr.rel (%p228) target = $region24
        $region23: #{tpu_custom_call.1} parent=11 // pred_region
          %s232 = ssub.s32 8192, 8192
          %233 = vsyncadd [#allocation6], %s232
          %s234 = sshll.u32 [#allocation7], 4
          %s235 = int_to_ptr.vmem [resolvable:$true] %s234
          %240 = dma.hbm_to_vmem [thread:$0]  %s3, 8192, %s235, [#allocation6], 128, 128, 8
        $region24: #{tpu_custom_call.1} parent=11 // pred_fallthru
          _
        // Predicated region
        $region25: #{tpu_custom_call.1} parent=11 // pred_check
          %p241 = pneg %p129
        $region26: #{tpu_custom_call.1} parent=11 // pred_check_branch
          %243 = sbr.rel (%p241) target = $region28
        $region27: #{tpu_custom_call.1} parent=11 // pred_region
          _
        $region28: #{tpu_custom_call.1} parent=11 // pred_fallthru
          _
        // Predicated region
        $region29: #{tpu_custom_call.1} parent=11 // pred_check
          %p244 = pneg %p150
        $region30: #{tpu_custom_call.1} parent=11 // pred_check_branch
          %246 = sbr.rel (%p244) target = $region32
        $region31: #{tpu_custom_call.1} parent=11 // pred_region
          _
        $region32: #{tpu_custom_call.1} parent=11 // pred_fallthru
          _
        // Predicated region
        $region33: #{tpu_custom_call.1} parent=11 // pred_check
          %p247 = pneg %p171
        $region34: #{tpu_custom_call.1} parent=11 // pred_check_branch
          %249 = sbr.rel (%p247) target = $region36
        $region35: #{tpu_custom_call.1} parent=11 // pred_region
          _
        $region36: #{tpu_custom_call.1} parent=11 // pred_fallthru
          _
      $region12: #{tpu_custom_call.1} parent=5 // pred_fallthru
        _
      %p250 = scmp.lt.s32.totalorder %s19, 2
      // Predicated region
      $region37: #{tpu_custom_call.1} parent=5 // pred_check
        %p251 = pneg %p250
      $region38: #{tpu_custom_call.1} parent=5 // pred_check_branch
        %253 = sbr.rel (%p251) target = $region40
      $region39: #{tpu_custom_call.1} parent=5 // pred_region
        // Predicated region
        $region41: #{tpu_custom_call.1} parent=39 // pred_check
          %p254 = pneg %p39
        $region42: #{tpu_custom_call.1} parent=39 // pred_check_branch
          %256 = sbr.rel (%p254) target = $region44
        $region43: #{tpu_custom_call.1} parent=39 // pred_region
          %s257 = sand.u32 %s29, 1
          %s258 = scalar_lea.sflag [#allocation4], %s257
          %s259 = sand.u32 %s29, 1
          %s260 = smul.addr %s259, 56
          %s261 = scalar_lea.vmem [#allocation3], %s260
          %s263 = ssub.s32 896, 896
          %264 = vsyncadd %s258, %s263
          %s265 = smul.addr %s19, 7
          %s266 = smul.addr %s265, 128
          %s267 = scalar_lea.hbm %s0, %s266
          %s269 = sshll.u32 %s261, 4
          %s270 = int_to_ptr.vmem [resolvable:$true] %s269
          %272 = dma.hbm_to_vmem [thread:$0]  %s267, 896, %s270, %s258
        $region44: #{tpu_custom_call.1} parent=39 // pred_fallthru
          _
      $region40: #{tpu_custom_call.1} parent=5 // pred_fallthru
        _
      %p273 = scmp.le.s32.totalorder 1, %s19
      %p274 = scmp.lt.s32.totalorder %s19, 3
      %p275 = pnand %p273, %p274
      %p276 = pneg %p275
      // Predicated region
      $region45: #{tpu_custom_call.1} parent=5 // pred_check
        _
      $region46: #{tpu_custom_call.1} parent=5 // pred_check_branch
        %278 = sbr.rel (%p275) target = $region48
      $region47: #{tpu_custom_call.1} parent=5 // pred_region
        %s279 = ssub.s32 %s19, 1
        %s280 = sand.u32 %s32, 1
        %s281 = scalar_lea.sflag [#allocation4], %s280
        %s282 = sand.u32 %s32, 1
        %s283 = smul.addr %s282, 56
        %s284 = scalar_lea.vmem [#allocation3], %s283
        // Predicated region
        $region49: #{tpu_custom_call.1} parent=47 // pred_check
          %p285 = pneg %p45
        $region50: #{tpu_custom_call.1} parent=47 // pred_check_branch
          %287 = sbr.rel (%p285) target = $region52
        $region51: #{tpu_custom_call.1} parent=47 // pred_region
          %288 = dma.done %s281, 896
        $region52: #{tpu_custom_call.1} parent=47 // pred_fallthru
          _
        // Predicated region
        $region53: #{tpu_custom_call.1} parent=47 // pred_check
          %p289 = pneg %p66
        $region54: #{tpu_custom_call.1} parent=47 // pred_check_branch
          %291 = sbr.rel (%p289) target = $region56
        $region55: #{tpu_custom_call.1} parent=47 // pred_region
          %292 = dma.done [#allocation6], 25088
        $region56: #{tpu_custom_call.1} parent=47 // pred_fallthru
          _
        // Predicated region
        $region57: #{tpu_custom_call.1} parent=47 // pred_check
          %p293 = pneg %p108
        $region58: #{tpu_custom_call.1} parent=47 // pred_check_branch
          %295 = sbr.rel (%p293) target = $region60
        $region59: #{tpu_custom_call.1} parent=47 // pred_region
          %296 = dma.done [#allocation6], 8192
        $region60: #{tpu_custom_call.1} parent=47 // pred_fallthru
          _
        %s297 = sand.u32 %s32, 1
        %s298 = scalar_lea.sflag [#allocation4], %s297
        %s299 = sand.u32 %s32, 1
        %s300 = smul.addr %s299, 56
        %s301 = scalar_lea.vmem [#allocation3], %s300
        %p302 = pneg %p45
        %p303 = pneg %p42
        %p304 = pneg %p66
        %p305 = pneg %p63
        %p306 = pneg %p87
        %p307 = pneg %p84
        %p308 = pneg %p108
        %p309 = pneg %p105
        %p310 = pneg %p129
        %p311 = pneg %p126
        %p312 = pneg %p150
        %p313 = pneg %p147
        %p314 = pneg %p171
        %p315 = pneg %p168
        %p316 = pneg %p197
        %p317 = pneg %p194
        %p318 = scmp.lt.s32.totalorder %s24, 1
        %s319 = scalar_select %p318, %s24, 1
        %s320 = smul.addr %s319, 8
        %s321 = scalar_lea.vmem %s7, %s320
        %p322 = scmp.lt.s32.totalorder %s24, 1
        %s323 = scalar_select %p322, %s24, 1
        %s324 = smul.addr %s323, 8
        %s325 = scalar_lea.vmem %s7, %s324
        %v327 = vld [vmem:[%s284] sm:$0xff]
        %v328 = vld [vmem:[%s284 + $0x8] sm:$0xff]
        %v329 = vld [vmem:[%s284 + $0x10] sm:$0xff]
        %v330 = vld [vmem:[%s284 + $0x18] sm:$0xff]
        %v331 = vld [vmem:[%s284 + $0x20] sm:$0xff]
        %v332 = vld [vmem:[%s284 + $0x28] sm:$0xff]
        %v333 = vld [vmem:[%s284 + $0x30] sm:$0xff]
        %v334 = vpack.c.bf16 %v327, %v327
        %v335 = vpack.c.bf16 %v328, %v328
        %v336 = vpack.c.bf16 %v329, %v329
        %v337 = vpack.c.bf16 %v330, %v330
        %v338 = vpack.c.bf16 %v331, %v331
        %v339 = vpack.c.bf16 %v332, %v332
        %v340 = vpack.c.bf16 %v333, %v333
        %v341 = vld [vmem:[#allocation5] sm:$0xff]
        %v342 = vld [vmem:[#allocation5 + $0x8] sm:$0xff]
        %v343 = vld [vmem:[#allocation5 + $0x10] sm:$0xff]
        %v344 = vld [vmem:[#allocation5 + $0x18] sm:$0xff]
        %v345 = vld [vmem:[#allocation5 + $0x20] sm:$0xff]
        %v346 = vld [vmem:[#allocation5 + $0x28] sm:$0xff]
        %v347 = vld [vmem:[#allocation5 + $0x30] sm:$0xff]
        %v348 = vld [vmem:[#allocation5 + $0x38] sm:$0xff]
        %v349 = vld [vmem:[#allocation5 + $0x40] sm:$0xff]
        %v350 = vld [vmem:[#allocation5 + $0x48] sm:$0xff]
        %v351 = vld [vmem:[#allocation5 + $0x50] sm:$0xff]
        %v352 = vld [vmem:[#allocation5 + $0x58] sm:$0xff]
        %v353 = vld [vmem:[#allocation5 + $0x60] sm:$0xff]
        %v354 = vld [vmem:[#allocation5 + $0x68] sm:$0xff]
        %v355 = vld [vmem:[#allocation5 + $0x70] sm:$0xff]
        %v356 = vld [vmem:[#allocation5 + $0x78] sm:$0xff]
        %v357 = vld [vmem:[#allocation5 + $0x80] sm:$0xff]
        %v358 = vld [vmem:[#allocation5 + $0x88] sm:$0xff]
        %v359 = vld [vmem:[#allocation5 + $0x90] sm:$0xff]
        %v360 = vld [vmem:[#allocation5 + $0x98] sm:$0xff]
        %v361 = vld [vmem:[#allocation5 + $0xa0] sm:$0xff]
        %v362 = vld [vmem:[#allocation5 + $0xa8] sm:$0xff]
        %v363 = vld [vmem:[#allocation5 + $0xb0] sm:$0xff]
        %v364 = vld [vmem:[#allocation5 + $0xb8] sm:$0xff]
        %v365 = vld [vmem:[#allocation5 + $0xc0] sm:$0xff]
        %v366 = vld [vmem:[#allocation5 + $0xc8] sm:$0xff]
        %v367 = vld [vmem:[#allocation5 + $0xd0] sm:$0xff]
        %v368 = vld [vmem:[#allocation5 + $0xd8] sm:$0xff]
        %v369 = vld [vmem:[#allocation5 + $0xe0] sm:$0xff]
        %v370 = vld [vmem:[#allocation5 + $0xe8] sm:$0xff]
        %v371 = vld [vmem:[#allocation5 + $0xf0] sm:$0xff]
        %v372 = vld [vmem:[#allocation5 + $0xf8] sm:$0xff]
        %v373 = vld [vmem:[#allocation5 + $0x100] sm:$0xff]
        %v374 = vld [vmem:[#allocation5 + $0x108] sm:$0xff]
        %v375 = vld [vmem:[#allocation5 + $0x110] sm:$0xff]
        %v376 = vld [vmem:[#allocation5 + $0x118] sm:$0xff]
        %v377 = vld [vmem:[#allocation5 + $0x120] sm:$0xff]
        %v378 = vld [vmem:[#allocation5 + $0x128] sm:$0xff]
        %v379 = vld [vmem:[#allocation5 + $0x130] sm:$0xff]
        %v380 = vld [vmem:[#allocation5 + $0x138] sm:$0xff]
        %v381 = vld [vmem:[#allocation5 + $0x140] sm:$0xff]
        %v382 = vld [vmem:[#allocation5 + $0x148] sm:$0xff]
        %v383 = vld [vmem:[#allocation5 + $0x150] sm:$0xff]
        %v384 = vld [vmem:[#allocation5 + $0x158] sm:$0xff]
        %v385 = vld [vmem:[#allocation5 + $0x160] sm:$0xff]
        %v386 = vld [vmem:[#allocation5 + $0x168] sm:$0xff]
        %v387 = vld [vmem:[#allocation5 + $0x170] sm:$0xff]
        %v388 = vld [vmem:[#allocation5 + $0x178] sm:$0xff]
        %v389 = vld [vmem:[#allocation5 + $0x180] sm:$0xff]
        %v390 = vld [vmem:[#allocation5 + $0x188] sm:$0xff]
        %v391 = vld [vmem:[#allocation5 + $0x190] sm:$0xff]
        %v392 = vld [vmem:[#allocation5 + $0x198] sm:$0xff]
        %v393 = vld [vmem:[#allocation5 + $0x1a0] sm:$0xff]
        %v394 = vld [vmem:[#allocation5 + $0x1a8] sm:$0xff]
        %v395 = vld [vmem:[#allocation5 + $0x1b0] sm:$0xff]
        %v396 = vld [vmem:[#allocation5 + $0x1b8] sm:$0xff]
        %v397 = vld [vmem:[#allocation5 + $0x1c0] sm:$0xff]
        %v398 = vld [vmem:[#allocation5 + $0x1c8] sm:$0xff]
        %v399 = vld [vmem:[#allocation5 + $0x1d0] sm:$0xff]
        %v400 = vld [vmem:[#allocation5 + $0x1d8] sm:$0xff]
        %v401 = vld [vmem:[#allocation5 + $0x1e0] sm:$0xff]
        %v402 = vld [vmem:[#allocation5 + $0x1e8] sm:$0xff]
        %v403 = vld [vmem:[#allocation5 + $0x1f0] sm:$0xff]
        %v404 = vld [vmem:[#allocation5 + $0x1f8] sm:$0xff]
        %v405 = vld [vmem:[#allocation5 + $0x200] sm:$0xff]
        %v406 = vld [vmem:[#allocation5 + $0x208] sm:$0xff]
        %v407 = vld [vmem:[#allocation5 + $0x210] sm:$0xff]
        %v408 = vld [vmem:[#allocation5 + $0x218] sm:$0xff]
        %v409 = vld [vmem:[#allocation5 + $0x220] sm:$0xff]
        %v410 = vld [vmem:[#allocation5 + $0x228] sm:$0xff]
        %v411 = vld [vmem:[#allocation5 + $0x230] sm:$0xff]
        %v412 = vld [vmem:[#allocation5 + $0x238] sm:$0xff]
        %v413 = vld [vmem:[#allocation5 + $0x240] sm:$0xff]
        %v414 = vld [vmem:[#allocation5 + $0x248] sm:$0xff]
        %v415 = vld [vmem:[#allocation5 + $0x250] sm:$0xff]
        %v416 = vld [vmem:[#allocation5 + $0x258] sm:$0xff]
        %v417 = vld [vmem:[#allocation5 + $0x260] sm:$0xff]
        %v418 = vld [vmem:[#allocation5 + $0x268] sm:$0xff]
        %v419 = vld [vmem:[#allocation5 + $0x270] sm:$0xff]
        %v420 = vld [vmem:[#allocation5 + $0x278] sm:$0xff]
        %v421 = vld [vmem:[#allocation5 + $0x280] sm:$0xff]
        %v422 = vld [vmem:[#allocation5 + $0x288] sm:$0xff]
        %v423 = vld [vmem:[#allocation5 + $0x290] sm:$0xff]
        %v424 = vld [vmem:[#allocation5 + $0x298] sm:$0xff]
        %v425 = vld [vmem:[#allocation5 + $0x2a0] sm:$0xff]
        %v426 = vld [vmem:[#allocation5 + $0x2a8] sm:$0xff]
        %v427 = vld [vmem:[#allocation5 + $0x2b0] sm:$0xff]
        %v428 = vld [vmem:[#allocation5 + $0x2b8] sm:$0xff]
        %v429 = vld [vmem:[#allocation5 + $0x2c0] sm:$0xff]
        %v430 = vld [vmem:[#allocation5 + $0x2c8] sm:$0xff]
        %v431 = vld [vmem:[#allocation5 + $0x2d0] sm:$0xff]
        %v432 = vld [vmem:[#allocation5 + $0x2d8] sm:$0xff]
        %v433 = vld [vmem:[#allocation5 + $0x2e0] sm:$0xff]
        %v434 = vld [vmem:[#allocation5 + $0x2e8] sm:$0xff]
        %v435 = vld [vmem:[#allocation5 + $0x2f0] sm:$0xff]
        %v436 = vld [vmem:[#allocation5 + $0x2f8] sm:$0xff]
        %v437 = vld [vmem:[#allocation5 + $0x300] sm:$0xff]
        %v438 = vld [vmem:[#allocation5 + $0x308] sm:$0xff]
        %v439 = vld [vmem:[#allocation5 + $0x310] sm:$0xff]
        %v440 = vld [vmem:[#allocation5 + $0x318] sm:$0xff]
        %v441 = vld [vmem:[#allocation5 + $0x320] sm:$0xff]
        %v442 = vld [vmem:[#allocation5 + $0x328] sm:$0xff]
        %v443 = vld [vmem:[#allocation5 + $0x330] sm:$0xff]
        %v444 = vld [vmem:[#allocation5 + $0x338] sm:$0xff]
        %v445 = vld [vmem:[#allocation5 + $0x340] sm:$0xff]
        %v446 = vld [vmem:[#allocation5 + $0x348] sm:$0xff]
        %v447 = vld [vmem:[#allocation5 + $0x350] sm:$0xff]
        %v448 = vld [vmem:[#allocation5 + $0x358] sm:$0xff]
        %v449 = vld [vmem:[#allocation5 + $0x360] sm:$0xff]
        %v450 = vld [vmem:[#allocation5 + $0x368] sm:$0xff]
        %v451 = vld [vmem:[#allocation5 + $0x370] sm:$0xff]
        %v452 = vld [vmem:[#allocation5 + $0x378] sm:$0xff]
        %v453 = vld [vmem:[#allocation5 + $0x380] sm:$0xff]
        %v454 = vld [vmem:[#allocation5 + $0x388] sm:$0xff]
        %v455 = vld [vmem:[#allocation5 + $0x390] sm:$0xff]
        %v456 = vld [vmem:[#allocation5 + $0x398] sm:$0xff]
        %v457 = vld [vmem:[#allocation5 + $0x3a0] sm:$0xff]
        %v458 = vld [vmem:[#allocation5 + $0x3a8] sm:$0xff]
        %v459 = vld [vmem:[#allocation5 + $0x3b0] sm:$0xff]
        %v460 = vld [vmem:[#allocation5 + $0x3b8] sm:$0xff]
        %v461 = vld [vmem:[#allocation5 + $0x3c0] sm:$0xff]
        %v462 = vld [vmem:[#allocation5 + $0x3c8] sm:$0xff]
        %v463 = vld [vmem:[#allocation5 + $0x3d0] sm:$0xff]
        %v464 = vld [vmem:[#allocation5 + $0x3d8] sm:$0xff]
        %v465 = vld [vmem:[#allocation5 + $0x3e0] sm:$0xff]
        %v466 = vld [vmem:[#allocation5 + $0x3e8] sm:$0xff]
        %v467 = vld [vmem:[#allocation5 + $0x3f0] sm:$0xff]
        %v468 = vld [vmem:[#allocation5 + $0x3f8] sm:$0xff]
        %v469 = vld [vmem:[#allocation5 + $0x400] sm:$0xff]
        %v470 = vld [vmem:[#allocation5 + $0x408] sm:$0xff]
        %v471 = vld [vmem:[#allocation5 + $0x410] sm:$0xff]
        %v472 = vld [vmem:[#allocation5 + $0x418] sm:$0xff]
        %v473 = vld [vmem:[#allocation5 + $0x420] sm:$0xff]
        %v474 = vld [vmem:[#allocation5 + $0x428] sm:$0xff]
        %v475 = vld [vmem:[#allocation5 + $0x430] sm:$0xff]
        %v476 = vld [vmem:[#allocation5 + $0x438] sm:$0xff]
        %v477 = vld [vmem:[#allocation5 + $0x440] sm:$0xff]
        %v478 = vld [vmem:[#allocation5 + $0x448] sm:$0xff]
        %v479 = vld [vmem:[#allocation5 + $0x450] sm:$0xff]
        %v480 = vld [vmem:[#allocation5 + $0x458] sm:$0xff]
        %v481 = vld [vmem:[#allocation5 + $0x460] sm:$0xff]
        %v482 = vld [vmem:[#allocation5 + $0x468] sm:$0xff]
        %v483 = vld [vmem:[#allocation5 + $0x470] sm:$0xff]
        %v484 = vld [vmem:[#allocation5 + $0x478] sm:$0xff]
        %v485 = vld [vmem:[#allocation5 + $0x480] sm:$0xff]
        %v486 = vld [vmem:[#allocation5 + $0x488] sm:$0xff]
        %v487 = vld [vmem:[#allocation5 + $0x490] sm:$0xff]
        %v488 = vld [vmem:[#allocation5 + $0x498] sm:$0xff]
        %v489 = vld [vmem:[#allocation5 + $0x4a0] sm:$0xff]
        %v490 = vld [vmem:[#allocation5 + $0x4a8] sm:$0xff]
        %v491 = vld [vmem:[#allocation5 + $0x4b0] sm:$0xff]
        %v492 = vld [vmem:[#allocation5 + $0x4b8] sm:$0xff]
        %v493 = vld [vmem:[#allocation5 + $0x4c0] sm:$0xff]
        %v494 = vld [vmem:[#allocation5 + $0x4c8] sm:$0xff]
        %v495 = vld [vmem:[#allocation5 + $0x4d0] sm:$0xff]
        %v496 = vld [vmem:[#allocation5 + $0x4d8] sm:$0xff]
        %v497 = vld [vmem:[#allocation5 + $0x4e0] sm:$0xff]
        %v498 = vld [vmem:[#allocation5 + $0x4e8] sm:$0xff]
        %v499 = vld [vmem:[#allocation5 + $0x4f0] sm:$0xff]
        %v500 = vld [vmem:[#allocation5 + $0x4f8] sm:$0xff]
        %v501 = vld [vmem:[#allocation5 + $0x500] sm:$0xff]
        %v502 = vld [vmem:[#allocation5 + $0x508] sm:$0xff]
        %v503 = vld [vmem:[#allocation5 + $0x510] sm:$0xff]
        %v504 = vld [vmem:[#allocation5 + $0x518] sm:$0xff]
        %v505 = vld [vmem:[#allocation5 + $0x520] sm:$0xff]
        %v506 = vld [vmem:[#allocation5 + $0x528] sm:$0xff]
        %v507 = vld [vmem:[#allocation5 + $0x530] sm:$0xff]
        %v508 = vld [vmem:[#allocation5 + $0x538] sm:$0xff]
        %v509 = vld [vmem:[#allocation5 + $0x540] sm:$0xff]
        %v510 = vld [vmem:[#allocation5 + $0x548] sm:$0xff]
        %v511 = vld [vmem:[#allocation5 + $0x550] sm:$0xff]
        %v512 = vld [vmem:[#allocation5 + $0x558] sm:$0xff]
        %v513 = vld [vmem:[#allocation5 + $0x560] sm:$0xff]
        %v514 = vld [vmem:[#allocation5 + $0x568] sm:$0xff]
        %v515 = vld [vmem:[#allocation5 + $0x570] sm:$0xff]
        %v516 = vld [vmem:[#allocation5 + $0x578] sm:$0xff]
        %v517 = vld [vmem:[#allocation5 + $0x580] sm:$0xff]
        %v518 = vld [vmem:[#allocation5 + $0x588] sm:$0xff]
        %v519 = vld [vmem:[#allocation5 + $0x590] sm:$0xff]
        %v520 = vld [vmem:[#allocation5 + $0x598] sm:$0xff]
        %v521 = vld [vmem:[#allocation5 + $0x5a0] sm:$0xff]
        %v522 = vld [vmem:[#allocation5 + $0x5a8] sm:$0xff]
        %v523 = vld [vmem:[#allocation5 + $0x5b0] sm:$0xff]
        %v524 = vld [vmem:[#allocation5 + $0x5b8] sm:$0xff]
        %v525 = vld [vmem:[#allocation5 + $0x5c0] sm:$0xff]
        %v526 = vld [vmem:[#allocation5 + $0x5c8] sm:$0xff]
        %v527 = vld [vmem:[#allocation5 + $0x5d0] sm:$0xff]
        %v528 = vld [vmem:[#allocation5 + $0x5d8] sm:$0xff]
        %v529 = vld [vmem:[#allocation5 + $0x5e0] sm:$0xff]
        %v530 = vld [vmem:[#allocation5 + $0x5e8] sm:$0xff]
        %v531 = vld [vmem:[#allocation5 + $0x5f0] sm:$0xff]
        %v532 = vld [vmem:[#allocation5 + $0x5f8] sm:$0xff]
        %v533 = vld [vmem:[#allocation5 + $0x600] sm:$0xff]
        %v534 = vld [vmem:[#allocation5 + $0x608] sm:$0xff]
        %v535 = vld [vmem:[#allocation5 + $0x610] sm:$0xff]
        %v536 = vld [vmem:[#allocation5 + $0x618] sm:$0xff]
        %v537 = vld [vmem:[%s2] sm:$0xf]
        %v539 = vlaneseq
        %v540 = vshrl.u32 %v539, 7
        %v541 = vsub.s32 0, %v540
        %v542 = vrot.slane %v537, %v541
        %v543 = vlaneseq
        %v544 = vshrl.u32 %v543, 7
        %v545 = vsub.s32 1, %v544
        %v546 = vrot.slane %v537, %v545
        %v547 = vlaneseq
        %v548 = vshrl.u32 %v547, 7
        %v549 = vsub.s32 2, %v548
        %v550 = vrot.slane %v537, %v549
        %v551 = vlaneseq
        %v552 = vshrl.u32 %v551, 7
        %v553 = vsub.s32 3, %v552
        %v554 = vrot.slane %v537, %v553
        %v755 = vunpack.c.l.b16 %v341
        %v756 = vunpack.c.h.b16 %v341
        %v757 = vunpack.c.l.b16 %v342
        %v758 = vunpack.c.h.b16 %v342
        %v759 = vunpack.c.l.b16 %v343
        %v760 = vunpack.c.h.b16 %v343
        %v761 = vunpack.c.l.b16 %v344
        %v762 = vunpack.c.h.b16 %v344
        %v763 = vunpack.c.l.b16 %v345
        %v764 = vunpack.c.h.b16 %v345
        %v765 = vunpack.c.l.b16 %v346
        %v766 = vunpack.c.h.b16 %v346
        %v767 = vunpack.c.l.b16 %v347
        %v768 = vunpack.c.h.b16 %v347
        %v769 = vunpack.c.l.b16 %v348
        %v770 = vunpack.c.h.b16 %v348
        %v771 = vunpack.c.l.b16 %v349
        %v772 = vunpack.c.h.b16 %v349
        %v773 = vunpack.c.l.b16 %v350
        %v774 = vunpack.c.h.b16 %v350
        %v775 = vunpack.c.l.b16 %v351
        %v776 = vunpack.c.h.b16 %v351
        %v777 = vunpack.c.l.b16 %v352
        %v778 = vunpack.c.h.b16 %v352
        %v779 = vunpack.c.l.b16 %v353
        %v780 = vunpack.c.h.b16 %v353
        %v781 = vunpack.c.l.b16 %v354
        %v782 = vunpack.c.h.b16 %v354
        %v783 = vunpack.c.l.b16 %v355
        %v784 = vunpack.c.h.b16 %v355
        %v785 = vunpack.c.l.b16 %v356
        %v786 = vunpack.c.h.b16 %v356
        %v787 = vunpack.c.l.b16 %v357
        %v788 = vunpack.c.h.b16 %v357
        %v789 = vunpack.c.l.b16 %v358
        %v790 = vunpack.c.h.b16 %v358
        %v791 = vunpack.c.l.b16 %v359
        %v792 = vunpack.c.h.b16 %v359
        %v793 = vunpack.c.l.b16 %v360
        %v794 = vunpack.c.h.b16 %v360
        %v795 = vunpack.c.l.b16 %v361
        %v796 = vunpack.c.h.b16 %v361
        %v797 = vunpack.c.l.b16 %v362
        %v798 = vunpack.c.h.b16 %v362
        %v799 = vunpack.c.l.b16 %v363
        %v800 = vunpack.c.h.b16 %v363
        %v801 = vunpack.c.l.b16 %v364
        %v802 = vunpack.c.h.b16 %v364
        %v803 = vunpack.c.l.b16 %v365
        %v804 = vunpack.c.h.b16 %v365
        %v805 = vunpack.c.l.b16 %v366
        %v806 = vunpack.c.h.b16 %v366
        %v807 = vunpack.c.l.b16 %v367
        %v808 = vunpack.c.h.b16 %v367
        %v809 = vunpack.c.l.b16 %v368
        %v810 = vunpack.c.h.b16 %v368
        %v811 = vunpack.c.l.b16 %v369
        %v812 = vunpack.c.h.b16 %v369
        %v813 = vunpack.c.l.b16 %v370
        %v814 = vunpack.c.h.b16 %v370
        %v815 = vunpack.c.l.b16 %v371
        %v816 = vunpack.c.h.b16 %v371
        %v817 = vunpack.c.l.b16 %v372
        %v818 = vunpack.c.h.b16 %v372
        %v819 = vunpack.c.l.b16 %v373
        %v820 = vunpack.c.h.b16 %v373
        %v821 = vunpack.c.l.b16 %v374
        %v822 = vunpack.c.h.b16 %v374
        %v823 = vunpack.c.l.b16 %v375
        %v824 = vunpack.c.h.b16 %v375
        %v825 = vunpack.c.l.b16 %v376
        %v826 = vunpack.c.h.b16 %v376
        %v827 = vunpack.c.l.b16 %v377
        %v828 = vunpack.c.h.b16 %v377
        %v829 = vunpack.c.l.b16 %v378
        %v830 = vunpack.c.h.b16 %v378
        %v831 = vunpack.c.l.b16 %v379
        %v832 = vunpack.c.h.b16 %v379
        %v833 = vunpack.c.l.b16 %v380
        %v834 = vunpack.c.h.b16 %v380
        %v835 = vunpack.c.l.b16 %v381
        %v836 = vunpack.c.h.b16 %v381
        %v837 = vunpack.c.l.b16 %v382
        %v838 = vunpack.c.h.b16 %v382
        %v839 = vunpack.c.l.b16 %v383
        %v840 = vunpack.c.h.b16 %v383
        %v841 = vunpack.c.l.b16 %v384
        %v842 = vunpack.c.h.b16 %v384
        %v843 = vunpack.c.l.b16 %v385
        %v844 = vunpack.c.h.b16 %v385
        %v845 = vunpack.c.l.b16 %v386
        %v846 = vunpack.c.h.b16 %v386
        %v847 = vunpack.c.l.b16 %v387
        %v848 = vunpack.c.h.b16 %v387
        %v849 = vunpack.c.l.b16 %v388
        %v850 = vunpack.c.h.b16 %v388
        %v851 = vunpack.c.l.b16 %v389
        %v852 = vunpack.c.h.b16 %v389
        %v853 = vunpack.c.l.b16 %v390
        %v854 = vunpack.c.h.b16 %v390
        %v855 = vunpack.c.l.b16 %v391
        %v856 = vunpack.c.h.b16 %v391
        %v857 = vunpack.c.l.b16 %v392
        %v858 = vunpack.c.h.b16 %v392
        %v859 = vunpack.c.l.b16 %v393
        %v860 = vunpack.c.h.b16 %v393
        %v861 = vunpack.c.l.b16 %v394
        %v862 = vunpack.c.h.b16 %v394
        %v863 = vunpack.c.l.b16 %v395
        %v864 = vunpack.c.h.b16 %v395
        %v865 = vunpack.c.l.b16 %v396
        %v866 = vunpack.c.h.b16 %v396
        %v867 = vunpack.c.l.b16 %v397
        %v868 = vunpack.c.h.b16 %v397
        %v869 = vunpack.c.l.b16 %v398
        %v870 = vunpack.c.h.b16 %v398
        %v871 = vunpack.c.l.b16 %v399
        %v872 = vunpack.c.h.b16 %v399
        %v873 = vunpack.c.l.b16 %v400
        %v874 = vunpack.c.h.b16 %v400
        %v875 = vunpack.c.l.b16 %v401
        %v876 = vunpack.c.h.b16 %v401
        %v877 = vunpack.c.l.b16 %v402
        %v878 = vunpack.c.h.b16 %v402
        %v879 = vunpack.c.l.b16 %v403
        %v880 = vunpack.c.h.b16 %v403
        %v881 = vunpack.c.l.b16 %v404
        %v882 = vunpack.c.h.b16 %v404
        %v883 = vunpack.c.l.b16 %v405
        %v884 = vunpack.c.h.b16 %v405
        %v885 = vunpack.c.l.b16 %v406
        %v886 = vunpack.c.h.b16 %v406
        %v887 = vunpack.c.l.b16 %v407
        %v888 = vunpack.c.h.b16 %v407
        %v889 = vunpack.c.l.b16 %v408
        %v890 = vunpack.c.h.b16 %v408
        %v891 = vunpack.c.l.b16 %v409
        %v892 = vunpack.c.h.b16 %v409
        %v893 = vunpack.c.l.b16 %v410
        %v894 = vunpack.c.h.b16 %v410
        %v895 = vunpack.c.l.b16 %v411
        %v896 = vunpack.c.h.b16 %v411
        %v897 = vunpack.c.l.b16 %v412
        %v898 = vunpack.c.h.b16 %v412
        %v899 = vunpack.c.l.b16 %v413
        %v900 = vunpack.c.h.b16 %v413
        %v901 = vunpack.c.l.b16 %v414
        %v902 = vunpack.c.h.b16 %v414
        %v903 = vunpack.c.l.b16 %v415
        %v904 = vunpack.c.h.b16 %v415
        %v905 = vunpack.c.l.b16 %v416
        %v906 = vunpack.c.h.b16 %v416
        %v907 = vunpack.c.l.b16 %v417
        %v908 = vunpack.c.h.b16 %v417
        %v909 = vunpack.c.l.b16 %v418
        %v910 = vunpack.c.h.b16 %v418
        %v911 = vunpack.c.l.b16 %v419
        %v912 = vunpack.c.h.b16 %v419
        %v913 = vunpack.c.l.b16 %v420
        %v914 = vunpack.c.h.b16 %v420
        %v915 = vunpack.c.l.b16 %v421
        %v916 = vunpack.c.h.b16 %v421
        %v917 = vunpack.c.l.b16 %v422
        %v918 = vunpack.c.h.b16 %v422
        %v919 = vunpack.c.l.b16 %v423
        %v920 = vunpack.c.h.b16 %v423
        %v921 = vunpack.c.l.b16 %v424
        %v922 = vunpack.c.h.b16 %v424
        %v923 = vunpack.c.l.b16 %v425
        %v924 = vunpack.c.h.b16 %v425
        %v925 = vunpack.c.l.b16 %v426
        %v926 = vunpack.c.h.b16 %v426
        %v927 = vunpack.c.l.b16 %v427
        %v928 = vunpack.c.h.b16 %v427
        %v929 = vunpack.c.l.b16 %v428
        %v930 = vunpack.c.h.b16 %v428
        %v931 = vunpack.c.l.b16 %v429
        %v932 = vunpack.c.h.b16 %v429
        %v933 = vunpack.c.l.b16 %v430
        %v934 = vunpack.c.h.b16 %v430
        %v935 = vunpack.c.l.b16 %v431
        %v936 = vunpack.c.h.b16 %v431
        %v937 = vunpack.c.l.b16 %v432
        %v938 = vunpack.c.h.b16 %v432
        %v939 = vunpack.c.l.b16 %v433
        %v940 = vunpack.c.h.b16 %v433
        %v941 = vunpack.c.l.b16 %v434
        %v942 = vunpack.c.h.b16 %v434
        %v943 = vunpack.c.l.b16 %v435
        %v944 = vunpack.c.h.b16 %v435
        %v945 = vunpack.c.l.b16 %v436
        %v946 = vunpack.c.h.b16 %v436
        %v947 = vunpack.c.l.b16 %v437
        %v948 = vunpack.c.h.b16 %v437
        %v949 = vunpack.c.l.b16 %v438
        %v950 = vunpack.c.h.b16 %v438
        %v951 = vunpack.c.l.b16 %v439
        %v952 = vunpack.c.h.b16 %v439
        %v953 = vunpack.c.l.b16 %v440
        %v954 = vunpack.c.h.b16 %v440
        %v955 = vunpack.c.l.b16 %v441
        %v956 = vunpack.c.h.b16 %v441
        %v957 = vunpack.c.l.b16 %v442
        %v958 = vunpack.c.h.b16 %v442
        %v959 = vunpack.c.l.b16 %v443
        %v960 = vunpack.c.h.b16 %v443
        %v961 = vunpack.c.l.b16 %v444
        %v962 = vunpack.c.h.b16 %v444
        %v963 = vunpack.c.l.b16 %v445
        %v964 = vunpack.c.h.b16 %v445
        %v965 = vunpack.c.l.b16 %v446
        %v966 = vunpack.c.h.b16 %v446
        %v967 = vunpack.c.l.b16 %v447
        %v968 = vunpack.c.h.b16 %v447
        %v969 = vunpack.c.l.b16 %v448
        %v970 = vunpack.c.h.b16 %v448
        %v971 = vunpack.c.l.b16 %v449
        %v972 = vunpack.c.h.b16 %v449
        %v973 = vunpack.c.l.b16 %v450
        %v974 = vunpack.c.h.b16 %v450
        %v975 = vunpack.c.l.b16 %v451
        %v976 = vunpack.c.h.b16 %v451
        %v977 = vunpack.c.l.b16 %v452
        %v978 = vunpack.c.h.b16 %v452
        %v979 = vunpack.c.l.b16 %v453
        %v980 = vunpack.c.h.b16 %v453
        %v981 = vunpack.c.l.b16 %v454
        %v982 = vunpack.c.h.b16 %v454
        %v983 = vunpack.c.l.b16 %v455
        %v984 = vunpack.c.h.b16 %v455
        %v985 = vunpack.c.l.b16 %v456
        %v986 = vunpack.c.h.b16 %v456
        %v987 = vunpack.c.l.b16 %v457
        %v988 = vunpack.c.h.b16 %v457
        %v989 = vunpack.c.l.b16 %v458
        %v990 = vunpack.c.h.b16 %v458
        %v991 = vunpack.c.l.b16 %v459
        %v992 = vunpack.c.h.b16 %v459
        %v993 = vunpack.c.l.b16 %v460
        %v994 = vunpack.c.h.b16 %v460
        %v995 = vunpack.c.l.b16 %v461
        %v996 = vunpack.c.h.b16 %v461
        %v997 = vunpack.c.l.b16 %v462
        %v998 = vunpack.c.h.b16 %v462
        %v999 = vunpack.c.l.b16 %v463
        %v1000 = vunpack.c.h.b16 %v463
        %v1001 = vunpack.c.l.b16 %v464
        %v1002 = vunpack.c.h.b16 %v464
        %v1003 = vunpack.c.l.b16 %v465
        %v1004 = vunpack.c.h.b16 %v465
        %v1005 = vunpack.c.l.b16 %v466
        %v1006 = vunpack.c.h.b16 %v466
        %v1007 = vunpack.c.l.b16 %v467
        %v1008 = vunpack.c.h.b16 %v467
        %v1009 = vunpack.c.l.b16 %v468
        %v1010 = vunpack.c.h.b16 %v468
        %v1011 = vunpack.c.l.b16 %v469
        %v1012 = vunpack.c.h.b16 %v469
        %v1013 = vunpack.c.l.b16 %v470
        %v1014 = vunpack.c.h.b16 %v470
        %v1015 = vunpack.c.l.b16 %v471
        %v1016 = vunpack.c.h.b16 %v471
        %v1017 = vunpack.c.l.b16 %v472
        %v1018 = vunpack.c.h.b16 %v472
        %v1019 = vunpack.c.l.b16 %v473
        %v1020 = vunpack.c.h.b16 %v473
        %v1021 = vunpack.c.l.b16 %v474
        %v1022 = vunpack.c.h.b16 %v474
        %v1023 = vunpack.c.l.b16 %v475
        %v1024 = vunpack.c.h.b16 %v475
        %v1025 = vunpack.c.l.b16 %v476
        %v1026 = vunpack.c.h.b16 %v476
        %v1027 = vunpack.c.l.b16 %v477
        %v1028 = vunpack.c.h.b16 %v477
        %v1029 = vunpack.c.l.b16 %v478
        %v1030 = vunpack.c.h.b16 %v478
        %v1031 = vunpack.c.l.b16 %v479
        %v1032 = vunpack.c.h.b16 %v479
        %v1033 = vunpack.c.l.b16 %v480
        %v1034 = vunpack.c.h.b16 %v480
        %v1035 = vunpack.c.l.b16 %v481
        %v1036 = vunpack.c.h.b16 %v481
        %v1037 = vunpack.c.l.b16 %v482
        %v1038 = vunpack.c.h.b16 %v482
        %v1039 = vunpack.c.l.b16 %v483
        %v1040 = vunpack.c.h.b16 %v483
        %v1041 = vunpack.c.l.b16 %v484
        %v1042 = vunpack.c.h.b16 %v484
        %v1043 = vunpack.c.l.b16 %v485
        %v1044 = vunpack.c.h.b16 %v485
        %v1045 = vunpack.c.l.b16 %v486
        %v1046 = vunpack.c.h.b16 %v486
        %v1047 = vunpack.c.l.b16 %v487
        %v1048 = vunpack.c.h.b16 %v487
        %v1049 = vunpack.c.l.b16 %v488
        %v1050 = vunpack.c.h.b16 %v488
        %v1051 = vunpack.c.l.b16 %v489
        %v1052 = vunpack.c.h.b16 %v489
        %v1053 = vunpack.c.l.b16 %v490
        %v1054 = vunpack.c.h.b16 %v490
        %v1055 = vunpack.c.l.b16 %v491
        %v1056 = vunpack.c.h.b16 %v491
        %v1057 = vunpack.c.l.b16 %v492
        %v1058 = vunpack.c.h.b16 %v492
        %v1059 = vunpack.c.l.b16 %v493
        %v1060 = vunpack.c.h.b16 %v493
        %v1061 = vunpack.c.l.b16 %v494
        %v1062 = vunpack.c.h.b16 %v494
        %v1063 = vunpack.c.l.b16 %v495
        %v1064 = vunpack.c.h.b16 %v495
        %v1065 = vunpack.c.l.b16 %v496
        %v1066 = vunpack.c.h.b16 %v496
        %v1067 = vunpack.c.l.b16 %v497
        %v1068 = vunpack.c.h.b16 %v497
        %v1069 = vunpack.c.l.b16 %v498
        %v1070 = vunpack.c.h.b16 %v498
        %v1071 = vunpack.c.l.b16 %v499
        %v1072 = vunpack.c.h.b16 %v499
        %v1073 = vunpack.c.l.b16 %v500
        %v1074 = vunpack.c.h.b16 %v500
        %v1075 = vunpack.c.l.b16 %v501
        %v1076 = vunpack.c.h.b16 %v501
        %v1077 = vunpack.c.l.b16 %v502
        %v1078 = vunpack.c.h.b16 %v502
        %v1079 = vunpack.c.l.b16 %v503
        %v1080 = vunpack.c.h.b16 %v503
        %v1081 = vunpack.c.l.b16 %v504
        %v1082 = vunpack.c.h.b16 %v504
        %v1083 = vunpack.c.l.b16 %v505
        %v1084 = vunpack.c.h.b16 %v505
        %v1085 = vunpack.c.l.b16 %v506
        %v1086 = vunpack.c.h.b16 %v506
        %v1087 = vunpack.c.l.b16 %v507
        %v1088 = vunpack.c.h.b16 %v507
        %v1089 = vunpack.c.l.b16 %v508
        %v1090 = vunpack.c.h.b16 %v508
        %v1091 = vunpack.c.l.b16 %v509
        %v1092 = vunpack.c.h.b16 %v509
        %v1093 = vunpack.c.l.b16 %v510
        %v1094 = vunpack.c.h.b16 %v510
        %v1095 = vunpack.c.l.b16 %v511
        %v1096 = vunpack.c.h.b16 %v511
        %v1097 = vunpack.c.l.b16 %v512
        %v1098 = vunpack.c.h.b16 %v512
        %v1099 = vunpack.c.l.b16 %v513
        %v1100 = vunpack.c.h.b16 %v513
        %v1101 = vunpack.c.l.b16 %v514
        %v1102 = vunpack.c.h.b16 %v514
        %v1103 = vunpack.c.l.b16 %v515
        %v1104 = vunpack.c.h.b16 %v515
        %v1105 = vunpack.c.l.b16 %v516
        %v1106 = vunpack.c.h.b16 %v516
        %v1107 = vunpack.c.l.b16 %v517
        %v1108 = vunpack.c.h.b16 %v517
        %v1109 = vunpack.c.l.b16 %v518
        %v1110 = vunpack.c.h.b16 %v518
        %v1111 = vunpack.c.l.b16 %v519
        %v1112 = vunpack.c.h.b16 %v519
        %v1113 = vunpack.c.l.b16 %v520
        %v1114 = vunpack.c.h.b16 %v520
        %v1115 = vunpack.c.l.b16 %v521
        %v1116 = vunpack.c.h.b16 %v521
        %v1117 = vunpack.c.l.b16 %v522
        %v1118 = vunpack.c.h.b16 %v522
        %v1119 = vunpack.c.l.b16 %v523
        %v1120 = vunpack.c.h.b16 %v523
        %v1121 = vunpack.c.l.b16 %v524
        %v1122 = vunpack.c.h.b16 %v524
        %v1123 = vunpack.c.l.b16 %v525
        %v1124 = vunpack.c.h.b16 %v525
        %v1125 = vunpack.c.l.b16 %v526
        %v1126 = vunpack.c.h.b16 %v526
        %v1127 = vunpack.c.l.b16 %v527
        %v1128 = vunpack.c.h.b16 %v527
        %v1129 = vunpack.c.l.b16 %v528
        %v1130 = vunpack.c.h.b16 %v528
        %v1131 = vunpack.c.l.b16 %v529
        %v1132 = vunpack.c.h.b16 %v529
        %v1133 = vunpack.c.l.b16 %v530
        %v1134 = vunpack.c.h.b16 %v530
        %v1135 = vunpack.c.l.b16 %v531
        %v1136 = vunpack.c.h.b16 %v531
        %v1137 = vunpack.c.l.b16 %v532
        %v1138 = vunpack.c.h.b16 %v532
        %v1139 = vunpack.c.l.b16 %v533
        %v1140 = vunpack.c.h.b16 %v533
        %v1141 = vunpack.c.l.b16 %v534
        %v1142 = vunpack.c.h.b16 %v534
        %v1143 = vunpack.c.l.b16 %v535
        %v1144 = vunpack.c.h.b16 %v535
        %v1145 = vunpack.c.l.b16 %v536
        %v1146 = vunpack.c.h.b16 %v536
        %v1147 = vpack.c.b16 %v759, %v755
        %v1148 = vpack.c.b16 %v760, %v756
        %v1149 = vpack.c.b16 %v761, %v757
        %v1150 = vpack.c.b16 %v762, %v758
        %v1151 = vpack.c.b16 %v767, %v763
        %v1152 = vpack.c.b16 %v768, %v764
        %v1153 = vpack.c.b16 %v769, %v765
        %v1154 = vpack.c.b16 %v770, %v766
        %v1155 = vpack.c.b16 %v775, %v771
        %v1156 = vpack.c.b16 %v776, %v772
        %v1157 = vpack.c.b16 %v777, %v773
        %v1158 = vpack.c.b16 %v778, %v774
        %v1159 = vpack.c.b16 %v783, %v779
        %v1160 = vpack.c.b16 %v784, %v780
        %v1161 = vpack.c.b16 %v785, %v781
        %v1162 = vpack.c.b16 %v786, %v782
        %v1163 = vpack.c.b16 %v791, %v787
        %v1164 = vpack.c.b16 %v792, %v788
        %v1165 = vpack.c.b16 %v793, %v789
        %v1166 = vpack.c.b16 %v794, %v790
        %v1167 = vpack.c.b16 %v799, %v795
        %v1168 = vpack.c.b16 %v800, %v796
        %v1169 = vpack.c.b16 %v801, %v797
        %v1170 = vpack.c.b16 %v802, %v798
        %v1171 = vpack.c.b16 %v807, %v803
        %v1172 = vpack.c.b16 %v808, %v804
        %v1173 = vpack.c.b16 %v809, %v805
        %v1174 = vpack.c.b16 %v810, %v806
        %v1175 = vpack.c.b16 %v815, %v811
        %v1176 = vpack.c.b16 %v816, %v812
        %v1177 = vpack.c.b16 %v817, %v813
        %v1178 = vpack.c.b16 %v818, %v814
        %v1179 = vpack.c.b16 %v823, %v819
        %v1180 = vpack.c.b16 %v824, %v820
        %v1181 = vpack.c.b16 %v825, %v821
        %v1182 = vpack.c.b16 %v826, %v822
        %v1183 = vpack.c.b16 %v831, %v827
        %v1184 = vpack.c.b16 %v832, %v828
        %v1185 = vpack.c.b16 %v833, %v829
        %v1186 = vpack.c.b16 %v834, %v830
        %v1187 = vpack.c.b16 %v839, %v835
        %v1188 = vpack.c.b16 %v840, %v836
        %v1189 = vpack.c.b16 %v841, %v837
        %v1190 = vpack.c.b16 %v842, %v838
        %v1191 = vpack.c.b16 %v847, %v843
        %v1192 = vpack.c.b16 %v848, %v844
        %v1193 = vpack.c.b16 %v849, %v845
        %v1194 = vpack.c.b16 %v850, %v846
        %v1195 = vpack.c.b16 %v855, %v851
        %v1196 = vpack.c.b16 %v856, %v852
        %v1197 = vpack.c.b16 %v857, %v853
        %v1198 = vpack.c.b16 %v858, %v854
        %v1199 = vpack.c.b16 %v863, %v859
        %v1200 = vpack.c.b16 %v864, %v860
        %v1201 = vpack.c.b16 %v865, %v861
        %v1202 = vpack.c.b16 %v866, %v862
        %v1203 = vpack.c.b16 %v871, %v867
        %v1204 = vpack.c.b16 %v872, %v868
        %v1205 = vpack.c.b16 %v873, %v869
        %v1206 = vpack.c.b16 %v874, %v870
        %v1207 = vpack.c.b16 %v879, %v875
        %v1208 = vpack.c.b16 %v880, %v876
        %v1209 = vpack.c.b16 %v881, %v877
        %v1210 = vpack.c.b16 %v882, %v878
        %v1211 = vpack.c.b16 %v887, %v883
        %v1212 = vpack.c.b16 %v888, %v884
        %v1213 = vpack.c.b16 %v889, %v885
        %v1214 = vpack.c.b16 %v890, %v886
        %v1215 = vpack.c.b16 %v895, %v891
        %v1216 = vpack.c.b16 %v896, %v892
        %v1217 = vpack.c.b16 %v897, %v893
        %v1218 = vpack.c.b16 %v898, %v894
        %v1219 = vpack.c.b16 %v903, %v899
        %v1220 = vpack.c.b16 %v904, %v900
        %v1221 = vpack.c.b16 %v905, %v901
        %v1222 = vpack.c.b16 %v906, %v902
        %v1223 = vpack.c.b16 %v911, %v907
        %v1224 = vpack.c.b16 %v912, %v908
        %v1225 = vpack.c.b16 %v913, %v909
        %v1226 = vpack.c.b16 %v914, %v910
        %v1227 = vpack.c.b16 %v919, %v915
        %v1228 = vpack.c.b16 %v920, %v916
        %v1229 = vpack.c.b16 %v921, %v917
        %v1230 = vpack.c.b16 %v922, %v918
        %v1231 = vpack.c.b16 %v927, %v923
        %v1232 = vpack.c.b16 %v928, %v924
        %v1233 = vpack.c.b16 %v929, %v925
        %v1234 = vpack.c.b16 %v930, %v926
        %v1235 = vpack.c.b16 %v935, %v931
        %v1236 = vpack.c.b16 %v936, %v932
        %v1237 = vpack.c.b16 %v937, %v933
        %v1238 = vpack.c.b16 %v938, %v934
        %v1239 = vpack.c.b16 %v943, %v939
        %v1240 = vpack.c.b16 %v944, %v940
        %v1241 = vpack.c.b16 %v945, %v941
        %v1242 = vpack.c.b16 %v946, %v942
        %v1243 = vpack.c.b16 %v951, %v947
        %v1244 = vpack.c.b16 %v952, %v948
        %v1245 = vpack.c.b16 %v953, %v949
        %v1246 = vpack.c.b16 %v954, %v950
        %v1247 = vpack.c.b16 %v959, %v955
        %v1248 = vpack.c.b16 %v960, %v956
        %v1249 = vpack.c.b16 %v961, %v957
        %v1250 = vpack.c.b16 %v962, %v958
        %v1251 = vpack.c.b16 %v967, %v963
        %v1252 = vpack.c.b16 %v968, %v964
        %v1253 = vpack.c.b16 %v969, %v965
        %v1254 = vpack.c.b16 %v970, %v966
        %v1255 = vpack.c.b16 %v975, %v971
        %v1256 = vpack.c.b16 %v976, %v972
        %v1257 = vpack.c.b16 %v977, %v973
        %v1258 = vpack.c.b16 %v978, %v974
        %v1259 = vpack.c.b16 %v983, %v979
        %v1260 = vpack.c.b16 %v984, %v980
        %v1261 = vpack.c.b16 %v985, %v981
        %v1262 = vpack.c.b16 %v986, %v982
        %v1263 = vpack.c.b16 %v991, %v987
        %v1264 = vpack.c.b16 %v992, %v988
        %v1265 = vpack.c.b16 %v993, %v989
        %v1266 = vpack.c.b16 %v994, %v990
        %v1267 = vpack.c.b16 %v999, %v995
        %v1268 = vpack.c.b16 %v1000, %v996
        %v1269 = vpack.c.b16 %v1001, %v997
        %v1270 = vpack.c.b16 %v1002, %v998
        %v1271 = vpack.c.b16 %v1007, %v1003
        %v1272 = vpack.c.b16 %v1008, %v1004
        %v1273 = vpack.c.b16 %v1009, %v1005
        %v1274 = vpack.c.b16 %v1010, %v1006
        %v1275 = vpack.c.b16 %v1015, %v1011
        %v1276 = vpack.c.b16 %v1016, %v1012
        %v1277 = vpack.c.b16 %v1017, %v1013
        %v1278 = vpack.c.b16 %v1018, %v1014
        %v1279 = vpack.c.b16 %v1023, %v1019
        %v1280 = vpack.c.b16 %v1024, %v1020
        %v1281 = vpack.c.b16 %v1025, %v1021
        %v1282 = vpack.c.b16 %v1026, %v1022
        %v1283 = vpack.c.b16 %v1031, %v1027
        %v1284 = vpack.c.b16 %v1032, %v1028
        %v1285 = vpack.c.b16 %v1033, %v1029
        %v1286 = vpack.c.b16 %v1034, %v1030
        %v1287 = vpack.c.b16 %v1039, %v1035
        %v1288 = vpack.c.b16 %v1040, %v1036
        %v1289 = vpack.c.b16 %v1041, %v1037
        %v1290 = vpack.c.b16 %v1042, %v1038
        %v1291 = vpack.c.b16 %v1047, %v1043
        %v1292 = vpack.c.b16 %v1048, %v1044
        %v1293 = vpack.c.b16 %v1049, %v1045
        %v1294 = vpack.c.b16 %v1050, %v1046
        %v1295 = vpack.c.b16 %v1055, %v1051
        %v1296 = vpack.c.b16 %v1056, %v1052
        %v1297 = vpack.c.b16 %v1057, %v1053
        %v1298 = vpack.c.b16 %v1058, %v1054
        %v1299 = vpack.c.b16 %v1063, %v1059
        %v1300 = vpack.c.b16 %v1064, %v1060
        %v1301 = vpack.c.b16 %v1065, %v1061
        %v1302 = vpack.c.b16 %v1066, %v1062
        %v1303 = vpack.c.b16 %v1071, %v1067
        %v1304 = vpack.c.b16 %v1072, %v1068
        %v1305 = vpack.c.b16 %v1073, %v1069
        %v1306 = vpack.c.b16 %v1074, %v1070
        %v1307 = vpack.c.b16 %v1079, %v1075
        %v1308 = vpack.c.b16 %v1080, %v1076
        %v1309 = vpack.c.b16 %v1081, %v1077
        %v1310 = vpack.c.b16 %v1082, %v1078
        %v1311 = vpack.c.b16 %v1087, %v1083
        %v1312 = vpack.c.b16 %v1088, %v1084
        %v1313 = vpack.c.b16 %v1089, %v1085
        %v1314 = vpack.c.b16 %v1090, %v1086
        %v1315 = vpack.c.b16 %v1095, %v1091
        %v1316 = vpack.c.b16 %v1096, %v1092
        %v1317 = vpack.c.b16 %v1097, %v1093
        %v1318 = vpack.c.b16 %v1098, %v1094
        %v1319 = vpack.c.b16 %v1103, %v1099
        %v1320 = vpack.c.b16 %v1104, %v1100
        %v1321 = vpack.c.b16 %v1105, %v1101
        %v1322 = vpack.c.b16 %v1106, %v1102
        %v1323 = vpack.c.b16 %v1111, %v1107
        %v1324 = vpack.c.b16 %v1112, %v1108
        %v1325 = vpack.c.b16 %v1113, %v1109
        %v1326 = vpack.c.b16 %v1114, %v1110
        %v1327 = vpack.c.b16 %v1119, %v1115
        %v1328 = vpack.c.b16 %v1120, %v1116
        %v1329 = vpack.c.b16 %v1121, %v1117
        %v1330 = vpack.c.b16 %v1122, %v1118
        %v1331 = vpack.c.b16 %v1127, %v1123
        %v1332 = vpack.c.b16 %v1128, %v1124
        %v1333 = vpack.c.b16 %v1129, %v1125
        %v1334 = vpack.c.b16 %v1130, %v1126
        %v1335 = vpack.c.b16 %v1135, %v1131
        %v1336 = vpack.c.b16 %v1136, %v1132
        %v1337 = vpack.c.b16 %v1137, %v1133
        %v1338 = vpack.c.b16 %v1138, %v1134
        %v1339 = vpack.c.b16 %v1143, %v1139
        %v1340 = vpack.c.b16 %v1144, %v1140
        %v1341 = vpack.c.b16 %v1145, %v1141
        %v1342 = vpack.c.b16 %v1146, %v1142
        %vm1539 = vcmask 130048
        %v1541 = vsel %vm1539, %v340, 0
        %1543 = vmatprep.subr.bf16.mxu0 %v1148
        %1544 = vmatpush1.bf16.msra.mxu0 %v1147
        %1545 = vmatprep.subr.bf16.mxu0 %v1152
        %1546 = vmatpush1.bf16.msra.mxu0 %v1151
        %1547 = vmatprep.subr.bf16.mxu0 %v1156
        %1548 = vmatpush1.bf16.msra.mxu0 %v1155
        %1549 = vmatprep.subr.bf16.mxu0 %v1160
        %1550 = vmatpush1.bf16.msra.mxu0 %v1159
        %1551 = vmatprep.subr.bf16.mxu0 %v1164
        %1552 = vmatpush1.bf16.msra.mxu0 %v1163
        %1553 = vmatprep.subr.bf16.mxu0 %v1168
        %1554 = vmatpush1.bf16.msra.mxu0 %v1167
        %1555 = vmatprep.subr.bf16.mxu0 %v1172
        %1556 = vmatpush1.bf16.msra.mxu0 %v1171
        %1557 = vmatprep.subr.bf16.mxu0 %v1176
        %1558 = vmatpush1.bf16.msra.mxu0 %v1175
        %1559 = vmatprep.subr.bf16.mxu0 %v1180
        %1560 = vmatpush1.bf16.msra.mxu0 %v1179
        %1561 = vmatprep.subr.bf16.mxu0 %v1184
        %1562 = vmatpush1.bf16.msra.mxu0 %v1183
        %1563 = vmatprep.subr.bf16.mxu0 %v1188
        %1564 = vmatpush1.bf16.msra.mxu0 %v1187
        %1565 = vmatprep.subr.bf16.mxu0 %v1192
        %1566 = vmatpush1.bf16.msra.mxu0 %v1191
        %1567 = vmatprep.subr.bf16.mxu0 %v1196
        %1568 = vmatpush1.bf16.msra.mxu0 %v1195
        %1569 = vmatprep.subr.bf16.mxu0 %v1200
        %1570 = vmatpush1.bf16.msra.mxu0 %v1199
        %1571 = vmatprep.subr.bf16.mxu0 %v1204
        %1572 = vmatpush1.bf16.msra.mxu0 %v1203
        %1573 = vmatprep.subr.bf16.mxu0 %v1208
        %1574 = vmatpush1.bf16.msra.mxu0 %v1207
        %1575 = vmatprep.mubr.bf16.mxu0 %v335
        %1576 = vmatmul.mubr.bf16.gmra.mrb[0].mxu0 %v334
        %v1577 = vpop.f32.mrb[0].mxu0
        %v1578 = vadd.f32 %v542, %v1577
        %v1579 = vpop.f32.mrb[0].mxu0
        %v1580 = vadd.f32 %v546, %v1579
        %v1581 = vpop.f32.mrb[0].mxu0
        %v1582 = vpop.f32.mrb[0].mxu0
        %1583 = vdwg.mxu0
        %1584 = vmatprep.subr.bf16.mxu0 %v1212
        %1585 = vmatpush1.bf16.msra.mxu0 %v1211
        %1586 = vmatprep.subr.bf16.mxu0 %v1216
        %1587 = vmatpush1.bf16.msra.mxu0 %v1215
        %1588 = vmatprep.subr.bf16.mxu0 %v1220
        %1589 = vmatpush1.bf16.msra.mxu0 %v1219
        %1590 = vmatprep.subr.bf16.mxu0 %v1224
        %1591 = vmatpush1.bf16.msra.mxu0 %v1223
        %1592 = vmatprep.subr.bf16.mxu0 %v1228
        %1593 = vmatpush1.bf16.msra.mxu0 %v1227
        %1594 = vmatprep.subr.bf16.mxu0 %v1232
        %1595 = vmatpush1.bf16.msra.mxu0 %v1231
        %1596 = vmatprep.subr.bf16.mxu0 %v1236
        %1597 = vmatpush1.bf16.msra.mxu0 %v1235
        %1598 = vmatprep.subr.bf16.mxu0 %v1240
        %1599 = vmatpush1.bf16.msra.mxu0 %v1239
        %1600 = vmatprep.subr.bf16.mxu0 %v1244
        %1601 = vmatpush1.bf16.msra.mxu0 %v1243
        %1602 = vmatprep.subr.bf16.mxu0 %v1248
        %1603 = vmatpush1.bf16.msra.mxu0 %v1247
        %1604 = vmatprep.subr.bf16.mxu0 %v1252
        %1605 = vmatpush1.bf16.msra.mxu0 %v1251
        %1606 = vmatprep.subr.bf16.mxu0 %v1256
        %1607 = vmatpush1.bf16.msra.mxu0 %v1255
        %1608 = vmatprep.subr.bf16.mxu0 %v1260
        %1609 = vmatpush1.bf16.msra.mxu0 %v1259
        %1610 = vmatprep.subr.bf16.mxu0 %v1264
        %1611 = vmatpush1.bf16.msra.mxu0 %v1263
        %1612 = vmatprep.subr.bf16.mxu0 %v1268
        %1613 = vmatpush1.bf16.msra.mxu0 %v1267
        %1614 = vmatprep.subr.bf16.mxu0 %v1272
        %1615 = vmatpush1.bf16.msra.mxu0 %v1271
        %1616 = vmatprep.mubr.bf16.mxu0 %v337
        %1617 = vmatmul.mubr.bf16.gmra.mrb[0].mxu0 %v336
        %v1618 = vpop.f32.mrb[0].mxu0
        %v1619 = vadd.f32 %v1578, %v1618
        %v1620 = vpop.f32.mrb[0].mxu0
        %v1621 = vadd.f32 %v1580, %v1620
        %v1622 = vpop.f32.mrb[0].mxu0
        %v1623 = vpop.f32.mrb[0].mxu0
        %1624 = vdwg.mxu0
        %1625 = vmatprep.subr.bf16.mxu0 %v1276
        %1626 = vmatpush1.bf16.msra.mxu0 %v1275
        %1627 = vmatprep.subr.bf16.mxu0 %v1280
        %1628 = vmatpush1.bf16.msra.mxu0 %v1279
        %1629 = vmatprep.subr.bf16.mxu0 %v1284
        %1630 = vmatpush1.bf16.msra.mxu0 %v1283
        %1631 = vmatprep.subr.bf16.mxu0 %v1288
        %1632 = vmatpush1.bf16.msra.mxu0 %v1287
        %1633 = vmatprep.subr.bf16.mxu0 %v1292
        %1634 = vmatpush1.bf16.msra.mxu0 %v1291
        %1635 = vmatprep.subr.bf16.mxu0 %v1296
        %1636 = vmatpush1.bf16.msra.mxu0 %v1295
        %1637 = vmatprep.subr.bf16.mxu0 %v1300
        %1638 = vmatpush1.bf16.msra.mxu0 %v1299
        %1639 = vmatprep.subr.bf16.mxu0 %v1304
        %1640 = vmatpush1.bf16.msra.mxu0 %v1303
        %1641 = vmatprep.subr.bf16.mxu0 %v1308
        %1642 = vmatpush1.bf16.msra.mxu0 %v1307
        %1643 = vmatprep.subr.bf16.mxu0 %v1312
        %1644 = vmatpush1.bf16.msra.mxu0 %v1311
        %1645 = vmatprep.subr.bf16.mxu0 %v1316
        %1646 = vmatpush1.bf16.msra.mxu0 %v1315
        %1647 = vmatprep.subr.bf16.mxu0 %v1320
        %1648 = vmatpush1.bf16.msra.mxu0 %v1319
        %1649 = vmatprep.subr.bf16.mxu0 %v1324
        %1650 = vmatpush1.bf16.msra.mxu0 %v1323
        %1651 = vmatprep.subr.bf16.mxu0 %v1328
        %1652 = vmatpush1.bf16.msra.mxu0 %v1327
        %1653 = vmatprep.subr.bf16.mxu0 %v1332
        %1654 = vmatpush1.bf16.msra.mxu0 %v1331
        %1655 = vmatprep.subr.bf16.mxu0 %v1336
        %1656 = vmatpush1.bf16.msra.mxu0 %v1335
        %1657 = vmatprep.mubr.bf16.mxu0 %v339
        %1658 = vmatmul.mubr.bf16.gmra.mrb[0].mxu0 %v338
        %v1659 = vpop.f32.mrb[0].mxu0
        %v1660 = vadd.f32 %v1619, %v1659
        %v1661 = vpop.f32.mrb[0].mxu0
        %v1662 = vadd.f32 %v1621, %v1661
        %v1663 = vpop.f32.mrb[0].mxu0
        %v1664 = vpop.f32.mrb[0].mxu0
        %1665 = vdwg.mxu0
        %1666 = vmatprep.subr.bf16.mxu0 %v1340
        %1667 = vmatpush1.bf16.msra.mxu0 %v1339
        %1668 = vmatprep.subr.bf16.mxu0 0
        %1669 = vmatpush1.bf16.msra.mxu0 0
        %1670 = vmatprep.subr.bf16.mxu0 0
        %1671 = vmatpush1.bf16.msra.mxu0 0
        %1672 = vmatprep.subr.bf16.mxu0 0
        %1673 = vmatpush1.bf16.msra.mxu0 0
        %1674 = vmatprep.subr.bf16.mxu0 0
        %1675 = vmatpush1.bf16.msra.mxu0 0
        %1676 = vmatprep.subr.bf16.mxu0 0
        %1677 = vmatpush1.bf16.msra.mxu0 0
        %1678 = vmatprep.subr.bf16.mxu0 0
        %1679 = vmatpush1.bf16.msra.mxu0 0
        %1680 = vmatprep.subr.bf16.mxu0 0
        %1681 = vmatpush1.bf16.msra.mxu0 0
        %1682 = vmatprep.subr.bf16.mxu0 0
        %1683 = vmatpush1.bf16.msra.mxu0 0
        %1684 = vmatprep.subr.bf16.mxu0 0
        %1685 = vmatpush1.bf16.msra.mxu0 0
        %1686 = vmatprep.subr.bf16.mxu0 0
        %1687 = vmatpush1.bf16.msra.mxu0 0
        %1688 = vmatprep.subr.bf16.mxu0 0
        %1689 = vmatpush1.bf16.msra.mxu0 0
        %1690 = vmatprep.subr.bf16.mxu0 0
        %1691 = vmatpush1.bf16.msra.mxu0 0
        %1692 = vmatprep.subr.bf16.mxu0 0
        %1693 = vmatpush1.bf16.msra.mxu0 0
        %1694 = vmatprep.subr.bf16.mxu0 0
        %1695 = vmatpush1.bf16.msra.mxu0 0
        %1696 = vmatprep.subr.bf16.mxu0 0
        %1697 = vmatpush1.bf16.msra.mxu0 0
        %1698 = vmatprep.mubr.bf16.mxu0 0
        %1699 = vmatmul.mubr.bf16.gmra.mrb[0].mxu0 %v1541
        %v1700 = vpop.f32.mrb[0].mxu0
        %v1701 = vadd.f32 %v1660, %v1700
        %v1702 = vpop.f32.mrb[0].mxu0
        %v1703 = vadd.f32 %v1662, %v1702
        %v1704 = vpop.f32.mrb[0].mxu0
        %v1705 = vpop.f32.mrb[0].mxu0
        %1706 = vdwg.mxu0
        %1707 = vmatprep.subr.bf16.mxu0 %v1150
        %1708 = vmatpush1.bf16.msra.mxu0 %v1149
        %1709 = vmatprep.subr.bf16.mxu0 %v1154
        %1710 = vmatpush1.bf16.msra.mxu0 %v1153
        %1711 = vmatprep.subr.bf16.mxu0 %v1158
        %1712 = vmatpush1.bf16.msra.mxu0 %v1157
        %1713 = vmatprep.subr.bf16.mxu0 %v1162
        %1714 = vmatpush1.bf16.msra.mxu0 %v1161
        %1715 = vmatprep.subr.bf16.mxu0 %v1166
        %1716 = vmatpush1.bf16.msra.mxu0 %v1165
        %1717 = vmatprep.subr.bf16.mxu0 %v1170
        %1718 = vmatpush1.bf16.msra.mxu0 %v1169
        %1719 = vmatprep.subr.bf16.mxu0 %v1174
        %1720 = vmatpush1.bf16.msra.mxu0 %v1173
        %1721 = vmatprep.subr.bf16.mxu0 %v1178
        %1722 = vmatpush1.bf16.msra.mxu0 %v1177
        %1723 = vmatprep.subr.bf16.mxu0 %v1182
        %1724 = vmatpush1.bf16.msra.mxu0 %v1181
        %1725 = vmatprep.subr.bf16.mxu0 %v1186
        %1726 = vmatpush1.bf16.msra.mxu0 %v1185
        %1727 = vmatprep.subr.bf16.mxu0 %v1190
        %1728 = vmatpush1.bf16.msra.mxu0 %v1189
        %1729 = vmatprep.subr.bf16.mxu0 %v1194
        %1730 = vmatpush1.bf16.msra.mxu0 %v1193
        %1731 = vmatprep.subr.bf16.mxu0 %v1198
        %1732 = vmatpush1.bf16.msra.mxu0 %v1197
        %1733 = vmatprep.subr.bf16.mxu0 %v1202
        %1734 = vmatpush1.bf16.msra.mxu0 %v1201
        %1735 = vmatprep.subr.bf16.mxu0 %v1206
        %1736 = vmatpush1.bf16.msra.mxu0 %v1205
        %1737 = vmatprep.subr.bf16.mxu0 %v1210
        %1738 = vmatpush1.bf16.msra.mxu0 %v1209
        %1739 = vmatprep.mubr.bf16.mxu0 %v335
        %1740 = vmatmul.mubr.bf16.gmra.mrb[0].mxu0 %v334
        %v1741 = vpop.f32.mrb[0].mxu0
        %v1742 = vadd.f32 %v550, %v1741
        %v1743 = vpop.f32.mrb[0].mxu0
        %v1744 = vadd.f32 %v554, %v1743
        %v1745 = vpop.f32.mrb[0].mxu0
        %v1746 = vpop.f32.mrb[0].mxu0
        %1747 = vdwg.mxu0
        %1748 = vmatprep.subr.bf16.mxu0 %v1214
        %1749 = vmatpush1.bf16.msra.mxu0 %v1213
        %1750 = vmatprep.subr.bf16.mxu0 %v1218
        %1751 = vmatpush1.bf16.msra.mxu0 %v1217
        %1752 = vmatprep.subr.bf16.mxu0 %v1222
        %1753 = vmatpush1.bf16.msra.mxu0 %v1221
        %1754 = vmatprep.subr.bf16.mxu0 %v1226
        %1755 = vmatpush1.bf16.msra.mxu0 %v1225
        %1756 = vmatprep.subr.bf16.mxu0 %v1230
        %1757 = vmatpush1.bf16.msra.mxu0 %v1229
        %1758 = vmatprep.subr.bf16.mxu0 %v1234
        %1759 = vmatpush1.bf16.msra.mxu0 %v1233
        %1760 = vmatprep.subr.bf16.mxu0 %v1238
        %1761 = vmatpush1.bf16.msra.mxu0 %v1237
        %1762 = vmatprep.subr.bf16.mxu0 %v1242
        %1763 = vmatpush1.bf16.msra.mxu0 %v1241
        %1764 = vmatprep.subr.bf16.mxu0 %v1246
        %1765 = vmatpush1.bf16.msra.mxu0 %v1245
        %1766 = vmatprep.subr.bf16.mxu0 %v1250
        %1767 = vmatpush1.bf16.msra.mxu0 %v1249
        %1768 = vmatprep.subr.bf16.mxu0 %v1254
        %1769 = vmatpush1.bf16.msra.mxu0 %v1253
        %1770 = vmatprep.subr.bf16.mxu0 %v1258
        %1771 = vmatpush1.bf16.msra.mxu0 %v1257
        %1772 = vmatprep.subr.bf16.mxu0 %v1262
        %1773 = vmatpush1.bf16.msra.mxu0 %v1261
        %1774 = vmatprep.subr.bf16.mxu0 %v1266
        %1775 = vmatpush1.bf16.msra.mxu0 %v1265
        %1776 = vmatprep.subr.bf16.mxu0 %v1270
        %1777 = vmatpush1.bf16.msra.mxu0 %v1269
        %1778 = vmatprep.subr.bf16.mxu0 %v1274
        %1779 = vmatpush1.bf16.msra.mxu0 %v1273
        %1780 = vmatprep.mubr.bf16.mxu0 %v337
        %1781 = vmatmul.mubr.bf16.gmra.mrb[0].mxu0 %v336
        %v1782 = vpop.f32.mrb[0].mxu0
        %v1783 = vadd.f32 %v1742, %v1782
        %v1784 = vpop.f32.mrb[0].mxu0
        %v1785 = vadd.f32 %v1744, %v1784
        %v1786 = vpop.f32.mrb[0].mxu0
        %v1787 = vpop.f32.mrb[0].mxu0
        %1788 = vdwg.mxu0
        %1789 = vmatprep.subr.bf16.mxu0 %v1278
        %1790 = vmatpush1.bf16.msra.mxu0 %v1277
        %1791 = vmatprep.subr.bf16.mxu0 %v1282
        %1792 = vmatpush1.bf16.msra.mxu0 %v1281
        %1793 = vmatprep.subr.bf16.mxu0 %v1286
        %1794 = vmatpush1.bf16.msra.mxu0 %v1285
        %1795 = vmatprep.subr.bf16.mxu0 %v1290
        %1796 = vmatpush1.bf16.msra.mxu0 %v1289
        %1797 = vmatprep.subr.bf16.mxu0 %v1294
        %1798 = vmatpush1.bf16.msra.mxu0 %v1293
        %1799 = vmatprep.subr.bf16.mxu0 %v1298
        %1800 = vmatpush1.bf16.msra.mxu0 %v1297
        %1801 = vmatprep.subr.bf16.mxu0 %v1302
        %1802 = vmatpush1.bf16.msra.mxu0 %v1301
        %1803 = vmatprep.subr.bf16.mxu0 %v1306
        %1804 = vmatpush1.bf16.msra.mxu0 %v1305
        %1805 = vmatprep.subr.bf16.mxu0 %v1310
        %1806 = vmatpush1.bf16.msra.mxu0 %v1309
        %1807 = vmatprep.subr.bf16.mxu0 %v1314
        %1808 = vmatpush1.bf16.msra.mxu0 %v1313
        %1809 = vmatprep.subr.bf16.mxu0 %v1318
        %1810 = vmatpush1.bf16.msra.mxu0 %v1317
        %1811 = vmatprep.subr.bf16.mxu0 %v1322
        %1812 = vmatpush1.bf16.msra.mxu0 %v1321
        %1813 = vmatprep.subr.bf16.mxu0 %v1326
        %1814 = vmatpush1.bf16.msra.mxu0 %v1325
        %1815 = vmatprep.subr.bf16.mxu0 %v1330
        %1816 = vmatpush1.bf16.msra.mxu0 %v1329
        %1817 = vmatprep.subr.bf16.mxu0 %v1334
        %1818 = vmatpush1.bf16.msra.mxu0 %v1333
        %1819 = vmatprep.subr.bf16.mxu0 %v1338
        %1820 = vmatpush1.bf16.msra.mxu0 %v1337
        %1821 = vmatprep.mubr.bf16.mxu0 %v339
        %1822 = vmatmul.mubr.bf16.gmra.mrb[0].mxu0 %v338
        %v1823 = vpop.f32.mrb[0].mxu0
        %v1824 = vadd.f32 %v1783, %v1823
        %v1825 = vpop.f32.mrb[0].mxu0
        %v1826 = vadd.f32 %v1785, %v1825
        %v1827 = vpop.f32.mrb[0].mxu0
        %v1828 = vpop.f32.mrb[0].mxu0
        %1829 = vdwg.mxu0
        %1830 = vmatprep.subr.bf16.mxu0 %v1342
        %1831 = vmatpush1.bf16.msra.mxu0 %v1341
        %1832 = vmatprep.subr.bf16.mxu0 0
        %1833 = vmatpush1.bf16.msra.mxu0 0
        %1834 = vmatprep.subr.bf16.mxu0 0
        %1835 = vmatpush1.bf16.msra.mxu0 0
        %1836 = vmatprep.subr.bf16.mxu0 0
        %1837 = vmatpush1.bf16.msra.mxu0 0
        %1838 = vmatprep.subr.bf16.mxu0 0
        %1839 = vmatpush1.bf16.msra.mxu0 0
        %1840 = vmatprep.subr.bf16.mxu0 0
        %1841 = vmatpush1.bf16.msra.mxu0 0
        %1842 = vmatprep.subr.bf16.mxu0 0
        %1843 = vmatpush1.bf16.msra.mxu0 0
        %1844 = vmatprep.subr.bf16.mxu0 0
        %1845 = vmatpush1.bf16.msra.mxu0 0
        %1846 = vmatprep.subr.bf16.mxu0 0
        %1847 = vmatpush1.bf16.msra.mxu0 0
        %1848 = vmatprep.subr.bf16.mxu0 0
        %1849 = vmatpush1.bf16.msra.mxu0 0
        %1850 = vmatprep.subr.bf16.mxu0 0
        %1851 = vmatpush1.bf16.msra.mxu0 0
        %1852 = vmatprep.subr.bf16.mxu0 0
        %1853 = vmatpush1.bf16.msra.mxu0 0
        %1854 = vmatprep.subr.bf16.mxu0 0
        %1855 = vmatpush1.bf16.msra.mxu0 0
        %1856 = vmatprep.subr.bf16.mxu0 0
        %1857 = vmatpush1.bf16.msra.mxu0 0
        %1858 = vmatprep.subr.bf16.mxu0 0
        %1859 = vmatpush1.bf16.msra.mxu0 0
        %1860 = vmatprep.subr.bf16.mxu0 0
        %1861 = vmatpush1.bf16.msra.mxu0 0
        %1862 = vmatprep.mubr.bf16.mxu0 0
        %1863 = vmatmul.mubr.bf16.gmra.mrb[0].mxu0 %v1541
        %v1864 = vpop.f32.mrb[0].mxu0
        %v1865 = vadd.f32 %v1824, %v1864
        %v1866 = vpop.f32.mrb[0].mxu0
        %v1867 = vadd.f32 %v1826, %v1866
        %v1868 = vpop.f32.mrb[0].mxu0
        %v1869 = vpop.f32.mrb[0].mxu0
        %1870 = vdwg.mxu0
        %v1871 = vmul.f32 %v1701, 0.2
        %v1872 = vmul.f32 %v1703, 0.2
        %v1873 = vmul.f32 %v1865, 0.2
        %v1874 = vmul.f32 %v1867, 0.2
        %v1875 = vmax.f32 %v1701, %v1871
        %v1876 = vmax.f32 %v1703, %v1872
        %v1877 = vmax.f32 %v1865, %v1873
        %v1878 = vmax.f32 %v1867, %v1874
        %v1879 = vpack.c.bf16 %v1875, %v1875
        %v1880 = vpack.c.bf16 %v1876, %v1876
        %v1881 = vpack.c.bf16 %v1877, %v1877
        %v1882 = vpack.c.bf16 %v1878, %v1878
        %v1883 = vld [vmem:[#allocation7] sm:$0xff]
        %v1884 = vld [vmem:[#allocation7 + $0x8] sm:$0xff]
        %v1885 = vld [vmem:[#allocation7 + $0x10] sm:$0xff]
        %v1886 = vld [vmem:[#allocation7 + $0x18] sm:$0xff]
        %v1887 = vld [vmem:[#allocation7 + $0x20] sm:$0xff]
        %v1888 = vld [vmem:[#allocation7 + $0x28] sm:$0xff]
        %v1889 = vld [vmem:[#allocation7 + $0x30] sm:$0xff]
        %v1890 = vld [vmem:[#allocation7 + $0x38] sm:$0xff]
        %v1891 = vld [vmem:[#allocation7 + $0x40] sm:$0xff]
        %v1892 = vld [vmem:[#allocation7 + $0x48] sm:$0xff]
        %v1893 = vld [vmem:[#allocation7 + $0x50] sm:$0xff]
        %v1894 = vld [vmem:[#allocation7 + $0x58] sm:$0xff]
        %v1895 = vld [vmem:[#allocation7 + $0x60] sm:$0xff]
        %v1896 = vld [vmem:[#allocation7 + $0x68] sm:$0xff]
        %v1897 = vld [vmem:[#allocation7 + $0x70] sm:$0xff]
        %v1898 = vld [vmem:[#allocation7 + $0x78] sm:$0xff]
        %v1899 = vld [vmem:[#allocation7 + $0x80] sm:$0xff]
        %v1900 = vld [vmem:[#allocation7 + $0x88] sm:$0xff]
        %v1901 = vld [vmem:[#allocation7 + $0x90] sm:$0xff]
        %v1902 = vld [vmem:[#allocation7 + $0x98] sm:$0xff]
        %v1903 = vld [vmem:[#allocation7 + $0xa0] sm:$0xff]
        %v1904 = vld [vmem:[#allocation7 + $0xa8] sm:$0xff]
        %v1905 = vld [vmem:[#allocation7 + $0xb0] sm:$0xff]
        %v1906 = vld [vmem:[#allocation7 + $0xb8] sm:$0xff]
        %v1907 = vld [vmem:[#allocation7 + $0xc0] sm:$0xff]
        %v1908 = vld [vmem:[#allocation7 + $0xc8] sm:$0xff]
        %v1909 = vld [vmem:[#allocation7 + $0xd0] sm:$0xff]
        %v1910 = vld [vmem:[#allocation7 + $0xd8] sm:$0xff]
        %v1911 = vld [vmem:[#allocation7 + $0xe0] sm:$0xff]
        %v1912 = vld [vmem:[#allocation7 + $0xe8] sm:$0xff]
        %v1913 = vld [vmem:[#allocation7 + $0xf0] sm:$0xff]
        %v1914 = vld [vmem:[#allocation7 + $0xf8] sm:$0xff]
        %v1915 = vld [vmem:[#allocation7 + $0x100] sm:$0xff]
        %v1916 = vld [vmem:[#allocation7 + $0x108] sm:$0xff]
        %v1917 = vld [vmem:[#allocation7 + $0x110] sm:$0xff]
        %v1918 = vld [vmem:[#allocation7 + $0x118] sm:$0xff]
        %v1919 = vld [vmem:[#allocation7 + $0x120] sm:$0xff]
        %v1920 = vld [vmem:[#allocation7 + $0x128] sm:$0xff]
        %v1921 = vld [vmem:[#allocation7 + $0x130] sm:$0xff]
        %v1922 = vld [vmem:[#allocation7 + $0x138] sm:$0xff]
        %v1923 = vld [vmem:[#allocation7 + $0x140] sm:$0xff]
        %v1924 = vld [vmem:[#allocation7 + $0x148] sm:$0xff]
        %v1925 = vld [vmem:[#allocation7 + $0x150] sm:$0xff]
        %v1926 = vld [vmem:[#allocation7 + $0x158] sm:$0xff]
        %v1927 = vld [vmem:[#allocation7 + $0x160] sm:$0xff]
        %v1928 = vld [vmem:[#allocation7 + $0x168] sm:$0xff]
        %v1929 = vld [vmem:[#allocation7 + $0x170] sm:$0xff]
        %v1930 = vld [vmem:[#allocation7 + $0x178] sm:$0xff]
        %v1931 = vld [vmem:[#allocation7 + $0x180] sm:$0xff]
        %v1932 = vld [vmem:[#allocation7 + $0x188] sm:$0xff]
        %v1933 = vld [vmem:[#allocation7 + $0x190] sm:$0xff]
        %v1934 = vld [vmem:[#allocation7 + $0x198] sm:$0xff]
        %v1935 = vld [vmem:[#allocation7 + $0x1a0] sm:$0xff]
        %v1936 = vld [vmem:[#allocation7 + $0x1a8] sm:$0xff]
        %v1937 = vld [vmem:[#allocation7 + $0x1b0] sm:$0xff]
        %v1938 = vld [vmem:[#allocation7 + $0x1b8] sm:$0xff]
        %v1939 = vld [vmem:[#allocation7 + $0x1c0] sm:$0xff]
        %v1940 = vld [vmem:[#allocation7 + $0x1c8] sm:$0xff]
        %v1941 = vld [vmem:[#allocation7 + $0x1d0] sm:$0xff]
        %v1942 = vld [vmem:[#allocation7 + $0x1d8] sm:$0xff]
        %v1943 = vld [vmem:[#allocation7 + $0x1e0] sm:$0xff]
        %v1944 = vld [vmem:[#allocation7 + $0x1e8] sm:$0xff]
        %v1945 = vld [vmem:[#allocation7 + $0x1f0] sm:$0xff]
        %v1946 = vld [vmem:[#allocation7 + $0x1f8] sm:$0xff]
        %v1947 = vld [vmem:[%s4] sm:$0x3]
        %v1949 = vlaneseq
        %v1950 = vshrl.u32 %v1949, 7
        %v1951 = vsub.s32 0, %v1950
        %v1952 = vrot.slane %v1947, %v1951
        %v1953 = vlaneseq
        %v1954 = vshrl.u32 %v1953, 7
        %v1955 = vsub.s32 1, %v1954
        %v1956 = vrot.slane %v1947, %v1955
        %v2023 = vunpack.c.l.b16 %v1883
        %v2024 = vunpack.c.h.b16 %v1883
        %v2025 = vunpack.c.l.b16 %v1884
        %v2026 = vunpack.c.h.b16 %v1884
        %v2027 = vunpack.c.l.b16 %v1885
        %v2028 = vunpack.c.h.b16 %v1885
        %v2029 = vunpack.c.l.b16 %v1886
        %v2030 = vunpack.c.h.b16 %v1886
        %v2031 = vunpack.c.l.b16 %v1887
        %v2032 = vunpack.c.h.b16 %v1887
        %v2033 = vunpack.c.l.b16 %v1888
        %v2034 = vunpack.c.h.b16 %v1888
        %v2035 = vunpack.c.l.b16 %v1889
        %v2036 = vunpack.c.h.b16 %v1889
        %v2037 = vunpack.c.l.b16 %v1890
        %v2038 = vunpack.c.h.b16 %v1890
        %v2039 = vunpack.c.l.b16 %v1891
        %v2040 = vunpack.c.h.b16 %v1891
        %v2041 = vunpack.c.l.b16 %v1892
        %v2042 = vunpack.c.h.b16 %v1892
        %v2043 = vunpack.c.l.b16 %v1893
        %v2044 = vunpack.c.h.b16 %v1893
        %v2045 = vunpack.c.l.b16 %v1894
        %v2046 = vunpack.c.h.b16 %v1894
        %v2047 = vunpack.c.l.b16 %v1895
        %v2048 = vunpack.c.h.b16 %v1895
        %v2049 = vunpack.c.l.b16 %v1896
        %v2050 = vunpack.c.h.b16 %v1896
        %v2051 = vunpack.c.l.b16 %v1897
        %v2052 = vunpack.c.h.b16 %v1897
        %v2053 = vunpack.c.l.b16 %v1898
        %v2054 = vunpack.c.h.b16 %v1898
        %v2055 = vunpack.c.l.b16 %v1899
        %v2056 = vunpack.c.h.b16 %v1899
        %v2057 = vunpack.c.l.b16 %v1900
        %v2058 = vunpack.c.h.b16 %v1900
        %v2059 = vunpack.c.l.b16 %v1901
        %v2060 = vunpack.c.h.b16 %v1901
        %v2061 = vunpack.c.l.b16 %v1902
        %v2062 = vunpack.c.h.b16 %v1902
        %v2063 = vunpack.c.l.b16 %v1903
        %v2064 = vunpack.c.h.b16 %v1903
        %v2065 = vunpack.c.l.b16 %v1904
        %v2066 = vunpack.c.h.b16 %v1904
        %v2067 = vunpack.c.l.b16 %v1905
        %v2068 = vunpack.c.h.b16 %v1905
        %v2069 = vunpack.c.l.b16 %v1906
        %v2070 = vunpack.c.h.b16 %v1906
        %v2071 = vunpack.c.l.b16 %v1907
        %v2072 = vunpack.c.h.b16 %v1907
        %v2073 = vunpack.c.l.b16 %v1908
        %v2074 = vunpack.c.h.b16 %v1908
        %v2075 = vunpack.c.l.b16 %v1909
        %v2076 = vunpack.c.h.b16 %v1909
        %v2077 = vunpack.c.l.b16 %v1910
        %v2078 = vunpack.c.h.b16 %v1910
        %v2079 = vunpack.c.l.b16 %v1911
        %v2080 = vunpack.c.h.b16 %v1911
        %v2081 = vunpack.c.l.b16 %v1912
        %v2082 = vunpack.c.h.b16 %v1912
        %v2083 = vunpack.c.l.b16 %v1913
        %v2084 = vunpack.c.h.b16 %v1913
        %v2085 = vunpack.c.l.b16 %v1914
        %v2086 = vunpack.c.h.b16 %v1914
        %v2087 = vunpack.c.l.b16 %v1915
        %v2088 = vunpack.c.h.b16 %v1915
        %v2089 = vunpack.c.l.b16 %v1916
        %v2090 = vunpack.c.h.b16 %v1916
        %v2091 = vunpack.c.l.b16 %v1917
        %v2092 = vunpack.c.h.b16 %v1917
        %v2093 = vunpack.c.l.b16 %v1918
        %v2094 = vunpack.c.h.b16 %v1918
        %v2095 = vunpack.c.l.b16 %v1919
        %v2096 = vunpack.c.h.b16 %v1919
        %v2097 = vunpack.c.l.b16 %v1920
        %v2098 = vunpack.c.h.b16 %v1920
        %v2099 = vunpack.c.l.b16 %v1921
        %v2100 = vunpack.c.h.b16 %v1921
        %v2101 = vunpack.c.l.b16 %v1922
        %v2102 = vunpack.c.h.b16 %v1922
        %v2103 = vunpack.c.l.b16 %v1923
        %v2104 = vunpack.c.h.b16 %v1923
        %v2105 = vunpack.c.l.b16 %v1924
        %v2106 = vunpack.c.h.b16 %v1924
        %v2107 = vunpack.c.l.b16 %v1925
        %v2108 = vunpack.c.h.b16 %v1925
        %v2109 = vunpack.c.l.b16 %v1926
        %v2110 = vunpack.c.h.b16 %v1926
        %v2111 = vunpack.c.l.b16 %v1927
        %v2112 = vunpack.c.h.b16 %v1927
        %v2113 = vunpack.c.l.b16 %v1928
        %v2114 = vunpack.c.h.b16 %v1928
        %v2115 = vunpack.c.l.b16 %v1929
        %v2116 = vunpack.c.h.b16 %v1929
        %v2117 = vunpack.c.l.b16 %v1930
        %v2118 = vunpack.c.h.b16 %v1930
        %v2119 = vunpack.c.l.b16 %v1931
        %v2120 = vunpack.c.h.b16 %v1931
        %v2121 = vunpack.c.l.b16 %v1932
        %v2122 = vunpack.c.h.b16 %v1932
        %v2123 = vunpack.c.l.b16 %v1933
        %v2124 = vunpack.c.h.b16 %v1933
        %v2125 = vunpack.c.l.b16 %v1934
        %v2126 = vunpack.c.h.b16 %v1934
        %v2127 = vunpack.c.l.b16 %v1935
        %v2128 = vunpack.c.h.b16 %v1935
        %v2129 = vunpack.c.l.b16 %v1936
        %v2130 = vunpack.c.h.b16 %v1936
        %v2131 = vunpack.c.l.b16 %v1937
        %v2132 = vunpack.c.h.b16 %v1937
        %v2133 = vunpack.c.l.b16 %v1938
        %v2134 = vunpack.c.h.b16 %v1938
        %v2135 = vunpack.c.l.b16 %v1939
        %v2136 = vunpack.c.h.b16 %v1939
        %v2137 = vunpack.c.l.b16 %v1940
        %v2138 = vunpack.c.h.b16 %v1940
        %v2139 = vunpack.c.l.b16 %v1941
        %v2140 = vunpack.c.h.b16 %v1941
        %v2141 = vunpack.c.l.b16 %v1942
        %v2142 = vunpack.c.h.b16 %v1942
        %v2143 = vunpack.c.l.b16 %v1943
        %v2144 = vunpack.c.h.b16 %v1943
        %v2145 = vunpack.c.l.b16 %v1944
        %v2146 = vunpack.c.h.b16 %v1944
        %v2147 = vunpack.c.l.b16 %v1945
        %v2148 = vunpack.c.h.b16 %v1945
        %v2149 = vunpack.c.l.b16 %v1946
        %v2150 = vunpack.c.h.b16 %v1946
        %v2151 = vpack.c.b16 %v2025, %v2023
        %v2152 = vpack.c.b16 %v2026, %v2024
        %v2153 = vpack.c.b16 %v2029, %v2027
        %v2154 = vpack.c.b16 %v2030, %v2028
        %v2155 = vpack.c.b16 %v2033, %v2031
        %v2156 = vpack.c.b16 %v2034, %v2032
        %v2157 = vpack.c.b16 %v2037, %v2035
        %v2158 = vpack.c.b16 %v2038, %v2036
        %v2159 = vpack.c.b16 %v2041, %v2039
        %v2160 = vpack.c.b16 %v2042, %v2040
        %v2161 = vpack.c.b16 %v2045, %v2043
        %v2162 = vpack.c.b16 %v2046, %v2044
        %v2163 = vpack.c.b16 %v2049, %v2047
        %v2164 = vpack.c.b16 %v2050, %v2048
        %v2165 = vpack.c.b16 %v2053, %v2051
        %v2166 = vpack.c.b16 %v2054, %v2052
        %v2167 = vpack.c.b16 %v2057, %v2055
        %v2168 = vpack.c.b16 %v2058, %v2056
        %v2169 = vpack.c.b16 %v2061, %v2059
        %v2170 = vpack.c.b16 %v2062, %v2060
        %v2171 = vpack.c.b16 %v2065, %v2063
        %v2172 = vpack.c.b16 %v2066, %v2064
        %v2173 = vpack.c.b16 %v2069, %v2067
        %v2174 = vpack.c.b16 %v2070, %v2068
        %v2175 = vpack.c.b16 %v2073, %v2071
        %v2176 = vpack.c.b16 %v2074, %v2072
        %v2177 = vpack.c.b16 %v2077, %v2075
        %v2178 = vpack.c.b16 %v2078, %v2076
        %v2179 = vpack.c.b16 %v2081, %v2079
        %v2180 = vpack.c.b16 %v2082, %v2080
        %v2181 = vpack.c.b16 %v2085, %v2083
        %v2182 = vpack.c.b16 %v2086, %v2084
        %v2183 = vpack.c.b16 %v2089, %v2087
        %v2184 = vpack.c.b16 %v2090, %v2088
        %v2185 = vpack.c.b16 %v2093, %v2091
        %v2186 = vpack.c.b16 %v2094, %v2092
        %v2187 = vpack.c.b16 %v2097, %v2095
        %v2188 = vpack.c.b16 %v2098, %v2096
        %v2189 = vpack.c.b16 %v2101, %v2099
        %v2190 = vpack.c.b16 %v2102, %v2100
        %v2191 = vpack.c.b16 %v2105, %v2103
        %v2192 = vpack.c.b16 %v2106, %v2104
        %v2193 = vpack.c.b16 %v2109, %v2107
        %v2194 = vpack.c.b16 %v2110, %v2108
        %v2195 = vpack.c.b16 %v2113, %v2111
        %v2196 = vpack.c.b16 %v2114, %v2112
        %v2197 = vpack.c.b16 %v2117, %v2115
        %v2198 = vpack.c.b16 %v2118, %v2116
        %v2199 = vpack.c.b16 %v2121, %v2119
        %v2200 = vpack.c.b16 %v2122, %v2120
        %v2201 = vpack.c.b16 %v2125, %v2123
        %v2202 = vpack.c.b16 %v2126, %v2124
        %v2203 = vpack.c.b16 %v2129, %v2127
        %v2204 = vpack.c.b16 %v2130, %v2128
        %v2205 = vpack.c.b16 %v2133, %v2131
        %v2206 = vpack.c.b16 %v2134, %v2132
        %v2207 = vpack.c.b16 %v2137, %v2135
        %v2208 = vpack.c.b16 %v2138, %v2136
        %v2209 = vpack.c.b16 %v2141, %v2139
        %v2210 = vpack.c.b16 %v2142, %v2140
        %v2211 = vpack.c.b16 %v2145, %v2143
        %v2212 = vpack.c.b16 %v2146, %v2144
        %v2213 = vpack.c.b16 %v2149, %v2147
        %v2214 = vpack.c.b16 %v2150, %v2148
        %2279 = vmatprep.subr.bf16.mxu0 %v2152
        %2280 = vmatpush1.bf16.msra.mxu0 %v2151
        %2281 = vmatprep.subr.bf16.mxu0 %v2154
        %2282 = vmatpush1.bf16.msra.mxu0 %v2153
        %2283 = vmatprep.subr.bf16.mxu0 %v2156
        %2284 = vmatpush1.bf16.msra.mxu0 %v2155
        %2285 = vmatprep.subr.bf16.mxu0 %v2158
        %2286 = vmatpush1.bf16.msra.mxu0 %v2157
        %2287 = vmatprep.subr.bf16.mxu0 %v2160
        %2288 = vmatpush1.bf16.msra.mxu0 %v2159
        %2289 = vmatprep.subr.bf16.mxu0 %v2162
        %2290 = vmatpush1.bf16.msra.mxu0 %v2161
        %2291 = vmatprep.subr.bf16.mxu0 %v2164
        %2292 = vmatpush1.bf16.msra.mxu0 %v2163
        %2293 = vmatprep.subr.bf16.mxu0 %v2166
        %2294 = vmatpush1.bf16.msra.mxu0 %v2165
        %2295 = vmatprep.subr.bf16.mxu0 %v2168
        %2296 = vmatpush1.bf16.msra.mxu0 %v2167
        %2297 = vmatprep.subr.bf16.mxu0 %v2170
        %2298 = vmatpush1.bf16.msra.mxu0 %v2169
        %2299 = vmatprep.subr.bf16.mxu0 %v2172
        %2300 = vmatpush1.bf16.msra.mxu0 %v2171
        %2301 = vmatprep.subr.bf16.mxu0 %v2174
        %2302 = vmatpush1.bf16.msra.mxu0 %v2173
        %2303 = vmatprep.subr.bf16.mxu0 %v2176
        %2304 = vmatpush1.bf16.msra.mxu0 %v2175
        %2305 = vmatprep.subr.bf16.mxu0 %v2178
        %2306 = vmatpush1.bf16.msra.mxu0 %v2177
        %2307 = vmatprep.subr.bf16.mxu0 %v2180
        %2308 = vmatpush1.bf16.msra.mxu0 %v2179
        %2309 = vmatprep.subr.bf16.mxu0 %v2182
        %2310 = vmatpush1.bf16.msra.mxu0 %v2181
        %2311 = vmatprep.mubr.bf16.mxu0 %v1880
        %2312 = vmatmul.mubr.bf16.gmra.mrb[0].mxu0 %v1879
        %v2313 = vpop.f32.mrb[0].mxu0
        %v2314 = vadd.f32 %v1952, %v2313
        %v2315 = vpop.f32.mrb[0].mxu0
        %v2316 = vadd.f32 %v1956, %v2315
        %v2317 = vpop.f32.mrb[0].mxu0
        %v2318 = vpop.f32.mrb[0].mxu0
        %2319 = vdwg.mxu0
        %2320 = vmatprep.subr.bf16.mxu0 %v2184
        %2321 = vmatpush1.bf16.msra.mxu0 %v2183
        %2322 = vmatprep.subr.bf16.mxu0 %v2186
        %2323 = vmatpush1.bf16.msra.mxu0 %v2185
        %2324 = vmatprep.subr.bf16.mxu0 %v2188
        %2325 = vmatpush1.bf16.msra.mxu0 %v2187
        %2326 = vmatprep.subr.bf16.mxu0 %v2190
        %2327 = vmatpush1.bf16.msra.mxu0 %v2189
        %2328 = vmatprep.subr.bf16.mxu0 %v2192
        %2329 = vmatpush1.bf16.msra.mxu0 %v2191
        %2330 = vmatprep.subr.bf16.mxu0 %v2194
        %2331 = vmatpush1.bf16.msra.mxu0 %v2193
        %2332 = vmatprep.subr.bf16.mxu0 %v2196
        %2333 = vmatpush1.bf16.msra.mxu0 %v2195
        %2334 = vmatprep.subr.bf16.mxu0 %v2198
        %2335 = vmatpush1.bf16.msra.mxu0 %v2197
        %2336 = vmatprep.subr.bf16.mxu0 %v2200
        %2337 = vmatpush1.bf16.msra.mxu0 %v2199
        %2338 = vmatprep.subr.bf16.mxu0 %v2202
        %2339 = vmatpush1.bf16.msra.mxu0 %v2201
        %2340 = vmatprep.subr.bf16.mxu0 %v2204
        %2341 = vmatpush1.bf16.msra.mxu0 %v2203
        %2342 = vmatprep.subr.bf16.mxu0 %v2206
        %2343 = vmatpush1.bf16.msra.mxu0 %v2205
        %2344 = vmatprep.subr.bf16.mxu0 %v2208
        %2345 = vmatpush1.bf16.msra.mxu0 %v2207
        %2346 = vmatprep.subr.bf16.mxu0 %v2210
        %2347 = vmatpush1.bf16.msra.mxu0 %v2209
        %2348 = vmatprep.subr.bf16.mxu0 %v2212
        %2349 = vmatpush1.bf16.msra.mxu0 %v2211
        %2350 = vmatprep.subr.bf16.mxu0 %v2214
        %2351 = vmatpush1.bf16.msra.mxu0 %v2213
        %2352 = vmatprep.mubr.bf16.mxu0 %v1882
        %2353 = vmatmul.mubr.bf16.gmra.mrb[0].mxu0 %v1881
        %v2354 = vpop.f32.mrb[0].mxu0
        %v2355 = vadd.f32 %v2314, %v2354
        %v2356 = vpop.f32.mrb[0].mxu0
        %v2357 = vadd.f32 %v2316, %v2356
        %v2358 = vpop.f32.mrb[0].mxu0
        %v2359 = vpop.f32.mrb[0].mxu0
        %2360 = vdwg.mxu0
        %v2361 = vmul.f32 %v2355, 0.2
        %v2362 = vmul.f32 %v2357, 0.2
        %v2363 = vmax.f32 %v2355, %v2361
        %v2364 = vmax.f32 %v2357, %v2362
        %v2365 = vld [vmem:[%s5] sm:$0x3]
        %v2367 = vlaneseq
        %v2368 = vshrl.u32 %v2367, 7
        %v2369 = vsub.s32 0, %v2368
        %v2370 = vrot.slane %v2365, %v2369
        %v2371 = vlaneseq
        %v2372 = vshrl.u32 %v2371, 7
        %v2373 = vsub.s32 1, %v2372
        %v2374 = vrot.slane %v2365, %v2373
        %v2377 = vmul.f32 %v2363, %v2370
        %v2378 = vmul.f32 %v2364, %v2374
        %v2379 = vadd.f32 %v2377, %v2378
        %2380 = vadd.xlane.f32.xlu0 %v2379
        %v2381 = vpop.xlane.xlu0 %2380
        %v2382 = vld [vmem:[#allocation2] sm:$0x1]
        %v2384 = vlaneseq
        %v2385 = vshrl.u32 %v2384, 7
        %v2386 = vsub.s32 0, %v2385
        %v2387 = vrot.slane %v2382, %v2386
        %v2389 = vadd.f32 %v2381, %v2387
        %v2390 = vxor.u32 %v2389, 2147483648
        %v2391 = vmul.f32 %v2390, 1.442695
        %v2392 = vpow.pop %v2391
        %v2393 = vadd.f32 %v2392, 1.0
        %v2394 = vrcp.pop %v2393
        %v2395 = vmul.f32 1.0, %v2394
        %vm2396 = vcmask 7168
        %2397 = vst.msk [vmem:[%s325] sm:$0xff] %vm2396, %v2395
        %p2398 = scmp.lt.s32.totalorder %s24, 1
        %s2399 = scalar_select %p2398, %s24, 1
        %s2400 = smul.addr %s2399, 8
        %s2401 = scalar_lea.vmem %s7, %s2400
        // Predicated region
        $region61: #{tpu_custom_call.1} parent=47 // pred_check
          %p2402 = pneg %p194
        $region62: #{tpu_custom_call.1} parent=47 // pred_check_branch
          %2404 = sbr.rel (%p2402) target = $region64
        $region63: #{tpu_custom_call.1} parent=47 // pred_region
          _
        $region64: #{tpu_custom_call.1} parent=47 // pred_fallthru
          _
      $region48: #{tpu_custom_call.1} parent=5 // pred_fallthru
        _
      %p2405 = scmp.le.s32.totalorder 2, %s19
      // Predicated region
      $region65: #{tpu_custom_call.1} parent=5 // pred_check
        %p2406 = pneg %p2405
      $region66: #{tpu_custom_call.1} parent=5 // pred_check_branch
        %2408 = sbr.rel (%p2406) target = $region68
      $region67: #{tpu_custom_call.1} parent=5 // pred_region
        %s2409 = ssub.s32 %s19, 2
        // Predicated region
        $region69: #{tpu_custom_call.1} parent=67 // pred_check
          %p2410 = pneg %p200
        $region70: #{tpu_custom_call.1} parent=67 // pred_check_branch
          %2412 = sbr.rel (%p2410) target = $region72
        $region71: #{tpu_custom_call.1} parent=67 // pred_region
          %p2413 = scmp.lt.s32.totalorder %s25, 1
          %s2414 = scalar_select %p2413, %s25, 1
          %s2415 = smul.addr %s2414, 8
          %s2416 = scalar_lea.vmem %s7, %s2415
        $region72: #{tpu_custom_call.1} parent=67 // pred_fallthru
          _
      $region68: #{tpu_custom_call.1} parent=5 // pred_fallthru
        _
    $region6: #{tpu_custom_call.1} parent=1 // loop_footer
      %s23 = sadd.s32 1, %s19
    $region7: #{tpu_custom_call.1} parent=1 // loop_footer_branch
      %18 = sbr.rel target = $region3
    $region8: #{tpu_custom_call.1} parent=1 // loop_exit
      _
    %2417 = vsyncpa [#allocation4], 1
    %s2418 = scalar_lea.sflag [#allocation4], 1
    %2419 = vsyncpa %s2418, 1
    %2420 = vsyncpa [#allocation6], 1

</llo_original>
